<compile_context>
chip_gen: v7x
topology: tpu7x:2x2x1
jax: 0.10.0
libtpu: 0.0.40
codegen_flags: <defaults>
</compile_context>

<pallas_src>
import jax
import jax.numpy as jnp
from jax.experimental import pallas as pl
from jax.experimental.pallas import tpu as pltpu


_LANE = 128
_SUBLANE = 8
_OUT_CHUNK = 128  # fc4 epilogue chunk width (multiple of 128 lanes)


def _round_up(n, m):
    return ((n + m - 1) // m) * m


def decoder_kernel(x_ref,
                   w1_ref, b1_ref,
                   w2_ref, b2_ref,
                   w3_ref, b3_ref,
                   w4_ref, b4_ref,
                   o_ref):
    # fc1 / fc2: tiny K, f32 on the MXU; lane-dense (tile, 128) activations.
    h = jnp.dot(x_ref[...], w1_ref[...], preferred_element_type=jnp.float32)
    h = jnp.maximum(h + b1_ref[...], 0.0)
    h = jnp.dot(h, w2_ref[...], preferred_element_type=jnp.float32)
    h = jnp.maximum(h + b2_ref[...], 0.0)
    # fc3: bf16 operands, f32 accumulate; epilogue in f32.
    h = jnp.dot(h.astype(jnp.bfloat16), w3_ref[...],
                preferred_element_type=jnp.float32)
    h = jnp.maximum(h + b3_ref[...], 0.0)
    # fc4 + tanh, chunked over the output columns so the EUP tanh of one chunk
    # overlaps the MXU matmul of the next (and no full-width f32 intermediate).
    h_bf16 = h.astype(jnp.bfloat16)
    n_out = o_ref.shape[1]  # static, multiple of 128
    for c in range(0, n_out, _OUT_CHUNK):
        acc = jnp.dot(h_bf16, w4_ref[:, c:c + _OUT_CHUNK],
                      preferred_element_type=jnp.float32)
        o_ref[:, c:c + _OUT_CHUNK] = jnp.tanh(
            acc + b4_ref[:, c:c + _OUT_CHUNK]).astype(o_ref.dtype)


def prepare_decoder_params(params):
    """One-time kernel prep.

    * Pads hidden widths (16, 64) up to 128 lanes with zeros (exact: zeros stay
      zero through bias-0 + ReLU and contribute nothing to the next matmul).
    * Pads fc4 output width up to a multiple of 128 lanes.
    * Stores w3 / w4 in bf16 (matmuls still accumulate in f32).
    """
    h1 = params["w1"].shape[1]               # 16
    h2 = params["w2"].shape[1]                # 64
    h3 = params["w3"].shape[1]                # 512
    out_size = params["w4"].shape[1]
    p1 = _round_up(h1, _LANE)                 # 128
    p2 = _round_up(h2, _LANE)                 # 128
    padded_out = _round_up(out_size, _LANE)

    kp = {}
    kp["w1"] = jnp.pad(params["w1"], ((0, 0), (0, p1 - h1))).astype(jnp.float32)
    kp["b1"] = jnp.pad(params["b1"], ((0, 0), (0, p1 - h1))).astype(jnp.float32)
    kp["w2"] = jnp.pad(params["w2"], ((0, p1 - h1), (0, p2 - h2))).astype(jnp.float32)
    kp["b2"] = jnp.pad(params["b2"], ((0, 0), (0, p2 - h2))).astype(jnp.float32)
    kp["w3"] = jnp.pad(params["w3"], ((0, p2 - h2), (0, 0))).astype(jnp.bfloat16)
    kp["b3"] = params["b3"].astype(jnp.float32)
    kp["w4"] = jnp.pad(params["w4"],
                       ((0, 0), (0, padded_out - out_size))).astype(jnp.bfloat16)
    kp["b4"] = jnp.pad(params["b4"],
                       ((0, 0), (0, padded_out - out_size))).astype(jnp.float32)
    _ = h3  # (kept for clarity; fc3 output width is already lane-dense)
    return kp, out_size


def decoder_forward(x, kparams, out_size):
    """x: (B, 2) float32. kparams: output of prepare_decoder_params."""
    B, in_features = x.shape
    padded_out = kparams["w4"].shape[1]

    # Tile selection:
    #  * B <= 256  : one fat grid step (tile = B rounded up to the sublane multiple).
    #  * B < 1024  : 256-row tiles -> grid >= 2 so both v7x TensorCores get work.
    #  * B >= 1024 : 512-row tiles -> amortize per-step overhead on v5e/v6e, grid still >= 2.
    if B <= 256:
        batch_tile = _round_up(B, _SUBLANE)
    elif B < 1024:
        batch_tile = 256
    else:
        batch_tile = 512
    padded_B = _round_up(B, batch_tile)

    if padded_B != B:
        x = jnp.pad(x, ((0, padded_B - B), (0, 0)))

    grid = (padded_B // batch_tile,)
    # Megacore-split only when each core gets a fat batch slice; otherwise a split
    # just duplicates the dominant w4 weight DMA per core.
    semantics = ("parallel",) if grid[0] > 1 else ("arbitrary",)

    def rep(shape):  # full-extent block, constant index map -> weight DMA'd once
        return pl.BlockSpec(shape, lambda i: (0, 0))

    grid_spec = pltpu.PrefetchScalarGridSpec(
        num_scalar_prefetch=0,
        grid=grid,
        in_specs=[
            pl.BlockSpec((batch_tile, in_features), lambda i: (i, 0)),
            rep(kparams["w1"].shape), rep(kparams["b1"].shape),
            rep(kparams["w2"].shape), rep(kparams["b2"].shape),
            rep(kparams["w3"].shape), rep(kparams["b3"].shape),
            rep(kparams["w4"].shape), rep(kparams["b4"].shape),
        ],
        out_specs=pl.BlockSpec((batch_tile, padded_out), lambda i: (i, 0)),
    )

    k1 = kparams["w1"].shape[1]
    k2 = kparams["w2"].shape[1]
    k3 = kparams["w3"].shape[1]
    flops = 2 * padded_B * (in_features * k1 + k1 * k2 + k2 * k3 + k3 * padded_out)
    bytes_accessed = (
        x.size * 4 + padded_B * padded_out * 4
        + sum(int(kparams[k].size) * kparams[k].dtype.itemsize
              for k in ("w1", "b1", "w2", "b2", "w3", "b3", "w4", "b4")))
    cost = pl.CostEstimate(flops=flops,
                           transcendentals=padded_B * padded_out,
                           bytes_accessed=bytes_accessed)

    out = pl.pallas_call(
        decoder_kernel,
        out_shape=jax.ShapeDtypeStruct((padded_B, padded_out), jnp.float32),
        grid_spec=grid_spec,
        compiler_params=pltpu.CompilerParams(
            dimension_semantics=semantics,
            vmem_limit_bytes=32 * 1024 * 1024),
        cost_estimate=cost,
    )(x,
      kparams["w1"], kparams["b1"],
      kparams["w2"], kparams["b2"],
      kparams["w3"], kparams["b3"],
      kparams["w4"], kparams["b4"])

    return out[:B, :out_size]


def init_params(key, output_size):
    """Deterministic PyTorch-Linear-like init; weights stored transposed (in, out)."""
    sizes = [(2, 16), (16, 64), (64, 512), (512, output_size)]
    params = {}
    keys = jax.random.split(key, 2 * len(sizes))
    for idx, (fan_in, fan_out) in enumerate(sizes):
        bound = 1.0 / jnp.sqrt(fan_in)
        w = jax.random.uniform(keys[2 * idx], (fan_in, fan_out),
                               minval=-bound, maxval=bound, dtype=jnp.float32)
        b = jax.random.uniform(keys[2 * idx + 1], (1, fan_out),
                               minval=-bound, maxval=bound, dtype=jnp.float32)
        params[f"w{idx + 1}"] = w
        params[f"b{idx + 1}"] = b
    return params


def decoder_ref(x, params):
    h = x
    h = jnp.maximum(h @ params["w1"] + params["b1"], 0.0)
    h = jnp.maximum(h @ params["w2"] + params["b2"], 0.0)
    h = jnp.maximum(h @ params["w3"] + params["b3"], 0.0)
    return jnp.tanh(h @ params["w4"] + params["b4"])


if __name__ == "__main__":
    key = jax.random.PRNGKey(0)
    k_param, k_x1, k_x2 = jax.random.split(key, 3)

    output_size = 784          # e.g. a 28x28 image decoder head
    params = init_params(k_param, output_size)
    kparams, out_size = prepare_decoder_params(params)

    # Small batch: single fat grid step (tile = 16, output padded 784 -> 896).
    x_small = jax.random.normal(k_x1, (16, 2), dtype=jnp.float32)
    out_small = jax.block_until_ready(decoder_forward(x_small, kparams, out_size))
    ref_small = decoder_ref(x_small, params)
    assert out_small.shape == (16, output_size)
    # bf16 fc3/fc4 operands -> loosened tolerance vs. the f32 reference.
    assert jnp.allclose(out_small, ref_small, atol=3e-2, rtol=3e-2), \
        float(jnp.max(jnp.abs(out_small - ref_small)))

    # Larger batch: 256-row tiles, grid=2, "parallel" across batch tiles.
    x_big = jax.random.normal(k_x2, (512, 2), dtype=jnp.float32)
    out_big = jax.block_until_ready(decoder_forward(x_big, kparams, out_size))
    ref_big = decoder_ref(x_big, params)
    assert out_big.shape == (512, output_size)
    assert jnp.allclose(out_big, ref_big, atol=3e-2, rtol=3e-2), \
        float(jnp.max(jnp.abs(out_big - ref_big)))

    print("KERNEL_OK")
</pallas_src>

<mosaic_0001>
module attributes {stable_mosaic.version = 11 : i64} {
  func.func @decoder_kernel(%arg0: i32, %arg1: memref<16x2xf32, #tpu.memory_space<vmem>>, %arg2: memref<2x128xf32, #tpu.memory_space<vmem>>, %arg3: memref<1x128xf32, #tpu.memory_space<vmem>>, %arg4: memref<128x128xf32, #tpu.memory_space<vmem>>, %arg5: memref<1x128xf32, #tpu.memory_space<vmem>>, %arg6: memref<128x512xbf16, #tpu.memory_space<vmem>>, %arg7: memref<1x512xf32, #tpu.memory_space<vmem>>, %arg8: memref<512x896xbf16, #tpu.memory_space<vmem>>, %arg9: memref<1x896xf32, #tpu.memory_space<vmem>>, %arg10: memref<16x896xf32, #tpu.memory_space<vmem>>) attributes {dimension_semantics = [#tpu.dimension_semantics<arbitrary>], iteration_bounds = array<i64: 1>, scalar_prefetch = 0 : i64, scratch_operands = 0 : i64, tpu.core_type = #tpu.core_type<tc>, window_params = [{transform_indices = @transform_0, window_bounds = array<i64: 16, 2>}, {pipeline_mode = #tpu.pipeline_mode<synchronous>, transform_indices = @transform_1, window_bounds = array<i64: 2, 128>}, {pipeline_mode = #tpu.pipeline_mode<synchronous>, transform_indices = @transform_2, window_bounds = array<i64: 1, 128>}, {pipeline_mode = #tpu.pipeline_mode<synchronous>, transform_indices = @transform_3, window_bounds = array<i64: 128, 128>}, {pipeline_mode = #tpu.pipeline_mode<synchronous>, transform_indices = @transform_4, window_bounds = array<i64: 1, 128>}, {pipeline_mode = #tpu.pipeline_mode<synchronous>, transform_indices = @transform_5, window_bounds = array<i64: 128, 512>}, {pipeline_mode = #tpu.pipeline_mode<synchronous>, transform_indices = @transform_6, window_bounds = array<i64: 1, 512>}, {pipeline_mode = #tpu.pipeline_mode<synchronous>, transform_indices = @transform_7, window_bounds = array<i64: 512, 896>}, {pipeline_mode = #tpu.pipeline_mode<synchronous>, transform_indices = @transform_8, window_bounds = array<i64: 1, 896>}, {transform_indices = @transform_9, window_bounds = array<i64: 16, 896>}]} {
    %c0 = arith.constant 0 : index
    %c0_0 = arith.constant 0 : index
    %0 = vector.load %arg1[%c0, %c0_0] : memref<16x2xf32, #tpu.memory_space<vmem>>, vector<16x2xf32>
    %c0_1 = arith.constant 0 : index
    %c0_2 = arith.constant 0 : index
    %1 = vector.load %arg2[%c0_1, %c0_2] : memref<2x128xf32, #tpu.memory_space<vmem>>, vector<2x128xf32>
    %cst = arith.constant dense<0.000000e+00> : vector<16x128xf32>
    %2 = tpu.matmul %0, %1, %cst {dimension_numbers = #tpu.dot_dimension_numbers<[1], [0], [0], [1], [0, 0, 1, 1], [], []>} : vector<16x2xf32>, vector<2x128xf32>, vector<16x128xf32> -> vector<16x128xf32>
    %c0_3 = arith.constant 0 : index
    %c0_4 = arith.constant 0 : index
    %3 = vector.load %arg3[%c0_3, %c0_4] : memref<1x128xf32, #tpu.memory_space<vmem>>, vector<1x128xf32>
    %4 = vector.broadcast %3 : vector<1x128xf32> to vector<16x128xf32>
    %5 = arith.addf %2, %4 : vector<16x128xf32>
    %cst_5 = arith.constant 0.000000e+00 : f32
    %6 = vector.broadcast %cst_5 : f32 to vector<16x128xf32>
    %7 = arith.maximumf %5, %6 : vector<16x128xf32>
    %c0_6 = arith.constant 0 : index
    %c0_7 = arith.constant 0 : index
    %8 = vector.load %arg4[%c0_6, %c0_7] : memref<128x128xf32, #tpu.memory_space<vmem>>, vector<128x128xf32>
    %cst_8 = arith.constant dense<0.000000e+00> : vector<16x128xf32>
    %9 = tpu.matmul %7, %8, %cst_8 {dimension_numbers = #tpu.dot_dimension_numbers<[1], [0], [0], [1], [0, 0, 1, 1], [], []>} : vector<16x128xf32>, vector<128x128xf32>, vector<16x128xf32> -> vector<16x128xf32>
    %c0_9 = arith.constant 0 : index
    %c0_10 = arith.constant 0 : index
    %10 = vector.load %arg5[%c0_9, %c0_10] : memref<1x128xf32, #tpu.memory_space<vmem>>, vector<1x128xf32>
    %11 = vector.broadcast %10 : vector<1x128xf32> to vector<16x128xf32>
    %12 = arith.addf %9, %11 : vector<16x128xf32>
    %cst_11 = arith.constant 0.000000e+00 : f32
    %13 = vector.broadcast %cst_11 : f32 to vector<16x128xf32>
    %14 = arith.maximumf %12, %13 : vector<16x128xf32>
    %15 = arith.truncf %14 : vector<16x128xf32> to vector<16x128xbf16>
    %c0_12 = arith.constant 0 : index
    %c0_13 = arith.constant 0 : index
    %16 = vector.load %arg6[%c0_12, %c0_13] : memref<128x512xbf16, #tpu.memory_space<vmem>>, vector<128x512xbf16>
    %cst_14 = arith.constant dense<0.000000e+00> : vector<16x512xf32>
    %17 = tpu.matmul %15, %16, %cst_14 {dimension_numbers = #tpu.dot_dimension_numbers<[1], [0], [0], [1], [0, 0, 1, 1], [], []>} : vector<16x128xbf16>, vector<128x512xbf16>, vector<16x512xf32> -> vector<16x512xf32>
    %c0_15 = arith.constant 0 : index
    %c0_16 = arith.constant 0 : index
    %18 = vector.load %arg7[%c0_15, %c0_16] : memref<1x512xf32, #tpu.memory_space<vmem>>, vector<1x512xf32>
    %19 = vector.broadcast %18 : vector<1x512xf32> to vector<16x512xf32>
    %20 = arith.addf %17, %19 : vector<16x512xf32>
    %cst_17 = arith.constant 0.000000e+00 : f32
    %21 = vector.broadcast %cst_17 : f32 to vector<16x512xf32>
    %22 = arith.maximumf %20, %21 : vector<16x512xf32>
    %23 = arith.truncf %22 : vector<16x512xf32> to vector<16x512xbf16>
    %c0_18 = arith.constant 0 : index
    %c0_19 = arith.constant 0 : index
    %24 = vector.load %arg8[%c0_18, %c0_19] : memref<512x896xbf16, #tpu.memory_space<vmem>>, vector<512x128xbf16>
    %cst_20 = arith.constant dense<0.000000e+00> : vector<16x128xf32>
    %25 = tpu.matmul %23, %24, %cst_20 {dimension_numbers = #tpu.dot_dimension_numbers<[1], [0], [0], [1], [0, 0, 1, 1], [], []>} : vector<16x512xbf16>, vector<512x128xbf16>, vector<16x128xf32> -> vector<16x128xf32>
    %c0_21 = arith.constant 0 : index
    %c0_22 = arith.constant 0 : index
    %26 = vector.load %arg9[%c0_21, %c0_22] : memref<1x896xf32, #tpu.memory_space<vmem>>, vector<1x128xf32>
    %27 = vector.broadcast %26 : vector<1x128xf32> to vector<16x128xf32>
    %28 = arith.addf %25, %27 : vector<16x128xf32>
    %29 = math.tanh %28 : vector<16x128xf32>
    %c0_23 = arith.constant 0 : index
    %c0_24 = arith.constant 0 : index
    %30 = vector.load %arg10[%c0_23, %c0_24] : memref<16x896xf32, #tpu.memory_space<vmem>>, vector<16x128xf32>
    tpu.vector_store %arg10[%c0_23, %c0_24], %29 {strides = array<i32>} : memref<16x896xf32, #tpu.memory_space<vmem>>, vector<16x128xf32>,
    %c0_25 = arith.constant 0 : index
    %c128 = arith.constant 128 : index
    %31 = vector.load %arg8[%c0_25, %c128] : memref<512x896xbf16, #tpu.memory_space<vmem>>, vector<512x128xbf16>
    %cst_26 = arith.constant dense<0.000000e+00> : vector<16x128xf32>
    %32 = tpu.matmul %23, %31, %cst_26 {dimension_numbers = #tpu.dot_dimension_numbers<[1], [0], [0], [1], [0, 0, 1, 1], [], []>} : vector<16x512xbf16>, vector<512x128xbf16>, vector<16x128xf32> -> vector<16x128xf32>
    %c0_27 = arith.constant 0 : index
    %c128_28 = arith.constant 128 : index
    %33 = vector.load %arg9[%c0_27, %c128_28] : memref<1x896xf32, #tpu.memory_space<vmem>>, vector<1x128xf32>
    %34 = vector.broadcast %33 : vector<1x128xf32> to vector<16x128xf32>
    %35 = arith.addf %32, %34 : vector<16x128xf32>
    %36 = math.tanh %35 : vector<16x128xf32>
    %c0_29 = arith.constant 0 : index
    %c128_30 = arith.constant 128 : index
    %37 = vector.load %arg10[%c0_29, %c128_30] : memref<16x896xf32, #tpu.memory_space<vmem>>, vector<16x128xf32>
    tpu.vector_store %arg10[%c0_29, %c128_30], %36 {strides = array<i32>} : memref<16x896xf32, #tpu.memory_space<vmem>>, vector<16x128xf32>,
    %c0_31 = arith.constant 0 : index
    %c256 = arith.constant 256 : index
    %38 = vector.load %arg8[%c0_31, %c256] : memref<512x896xbf16, #tpu.memory_space<vmem>>, vector<512x128xbf16>
    %cst_32 = arith.constant dense<0.000000e+00> : vector<16x128xf32>
    %39 = tpu.matmul %23, %38, %cst_32 {dimension_numbers = #tpu.dot_dimension_numbers<[1], [0], [0], [1], [0, 0, 1, 1], [], []>} : vector<16x512xbf16>, vector<512x128xbf16>, vector<16x128xf32> -> vector<16x128xf32>
    %c0_33 = arith.constant 0 : index
    %c256_34 = arith.constant 256 : index
    %40 = vector.load %arg9[%c0_33, %c256_34] : memref<1x896xf32, #tpu.memory_space<vmem>>, vector<1x128xf32>
    %41 = vector.broadcast %40 : vector<1x128xf32> to vector<16x128xf32>
    %42 = arith.addf %39, %41 : vector<16x128xf32>
    %43 = math.tanh %42 : vector<16x128xf32>
    %c0_35 = arith.constant 0 : index
    %c256_36 = arith.constant 256 : index
    %44 = vector.load %arg10[%c0_35, %c256_36] : memref<16x896xf32, #tpu.memory_space<vmem>>, vector<16x128xf32>
    tpu.vector_store %arg10[%c0_35, %c256_36], %43 {strides = array<i32>} : memref<16x896xf32, #tpu.memory_space<vmem>>, vector<16x128xf32>,
    %c0_37 = arith.constant 0 : index
    %c384 = arith.constant 384 : index
    %45 = vector.load %arg8[%c0_37, %c384] : memref<512x896xbf16, #tpu.memory_space<vmem>>, vector<512x128xbf16>
    %cst_38 = arith.constant dense<0.000000e+00> : vector<16x128xf32>
    %46 = tpu.matmul %23, %45, %cst_38 {dimension_numbers = #tpu.dot_dimension_numbers<[1], [0], [0], [1], [0, 0, 1, 1], [], []>} : vector<16x512xbf16>, vector<512x128xbf16>, vector<16x128xf32> -> vector<16x128xf32>
    %c0_39 = arith.constant 0 : index
    %c384_40 = arith.constant 384 : index
    %47 = vector.load %arg9[%c0_39, %c384_40] : memref<1x896xf32, #tpu.memory_space<vmem>>, vector<1x128xf32>
    %48 = vector.broadcast %47 : vector<1x128xf32> to vector<16x128xf32>
    %49 = arith.addf %46, %48 : vector<16x128xf32>
    %50 = math.tanh %49 : vector<16x128xf32>
    %c0_41 = arith.constant 0 : index
    %c384_42 = arith.constant 384 : index
    %51 = vector.load %arg10[%c0_41, %c384_42] : memref<16x896xf32, #tpu.memory_space<vmem>>, vector<16x128xf32>
    tpu.vector_store %arg10[%c0_41, %c384_42], %50 {strides = array<i32>} : memref<16x896xf32, #tpu.memory_space<vmem>>, vector<16x128xf32>,
    %c0_43 = arith.constant 0 : index
    %c512 = arith.constant 512 : index
    %52 = vector.load %arg8[%c0_43, %c512] : memref<512x896xbf16, #tpu.memory_space<vmem>>, vector<512x128xbf16>
    %cst_44 = arith.constant dense<0.000000e+00> : vector<16x128xf32>
    %53 = tpu.matmul %23, %52, %cst_44 {dimension_numbers = #tpu.dot_dimension_numbers<[1], [0], [0], [1], [0, 0, 1, 1], [], []>} : vector<16x512xbf16>, vector<512x128xbf16>, vector<16x128xf32> -> vector<16x128xf32>
    %c0_45 = arith.constant 0 : index
    %c512_46 = arith.constant 512 : index
    %54 = vector.load %arg9[%c0_45, %c512_46] : memref<1x896xf32, #tpu.memory_space<vmem>>, vector<1x128xf32>
    %55 = vector.broadcast %54 : vector<1x128xf32> to vector<16x128xf32>
    %56 = arith.addf %53, %55 : vector<16x128xf32>
    %57 = math.tanh %56 : vector<16x128xf32>
    %c0_47 = arith.constant 0 : index
    %c512_48 = arith.constant 512 : index
    %58 = vector.load %arg10[%c0_47, %c512_48] : memref<16x896xf32, #tpu.memory_space<vmem>>, vector<16x128xf32>
    tpu.vector_store %arg10[%c0_47, %c512_48], %57 {strides = array<i32>} : memref<16x896xf32, #tpu.memory_space<vmem>>, vector<16x128xf32>,
    %c0_49 = arith.constant 0 : index
    %c640 = arith.constant 640 : index
    %59 = vector.load %arg8[%c0_49, %c640] : memref<512x896xbf16, #tpu.memory_space<vmem>>, vector<512x128xbf16>
    %cst_50 = arith.constant dense<0.000000e+00> : vector<16x128xf32>
    %60 = tpu.matmul %23, %59, %cst_50 {dimension_numbers = #tpu.dot_dimension_numbers<[1], [0], [0], [1], [0, 0, 1, 1], [], []>} : vector<16x512xbf16>, vector<512x128xbf16>, vector<16x128xf32> -> vector<16x128xf32>
    %c0_51 = arith.constant 0 : index
    %c640_52 = arith.constant 640 : index
    %61 = vector.load %arg9[%c0_51, %c640_52] : memref<1x896xf32, #tpu.memory_space<vmem>>, vector<1x128xf32>
    %62 = vector.broadcast %61 : vector<1x128xf32> to vector<16x128xf32>
    %63 = arith.addf %60, %62 : vector<16x128xf32>
    %64 = math.tanh %63 : vector<16x128xf32>
    %c0_53 = arith.constant 0 : index
    %c640_54 = arith.constant 640 : index
    %65 = vector.load %arg10[%c0_53, %c640_54] : memref<16x896xf32, #tpu.memory_space<vmem>>, vector<16x128xf32>
    tpu.vector_store %arg10[%c0_53, %c640_54], %64 {strides = array<i32>} : memref<16x896xf32, #tpu.memory_space<vmem>>, vector<16x128xf32>,
    %c0_55 = arith.constant 0 : index
    %c768 = arith.constant 768 : index
    %66 = vector.load %arg8[%c0_55, %c768] : memref<512x896xbf16, #tpu.memory_space<vmem>>, vector<512x128xbf16>
    %cst_56 = arith.constant dense<0.000000e+00> : vector<16x128xf32>
    %67 = tpu.matmul %23, %66, %cst_56 {dimension_numbers = #tpu.dot_dimension_numbers<[1], [0], [0], [1], [0, 0, 1, 1], [], []>} : vector<16x512xbf16>, vector<512x128xbf16>, vector<16x128xf32> -> vector<16x128xf32>
    %c0_57 = arith.constant 0 : index
    %c768_58 = arith.constant 768 : index
    %68 = vector.load %arg9[%c0_57, %c768_58] : memref<1x896xf32, #tpu.memory_space<vmem>>, vector<1x128xf32>
    %69 = vector.broadcast %68 : vector<1x128xf32> to vector<16x128xf32>
    %70 = arith.addf %67, %69 : vector<16x128xf32>
    %71 = math.tanh %70 : vector<16x128xf32>
    %c0_59 = arith.constant 0 : index
    %c768_60 = arith.constant 768 : index
    %72 = vector.load %arg10[%c0_59, %c768_60] : memref<16x896xf32, #tpu.memory_space<vmem>>, vector<16x128xf32>
    tpu.vector_store %arg10[%c0_59, %c768_60], %71 {strides = array<i32>} : memref<16x896xf32, #tpu.memory_space<vmem>>, vector<16x128xf32>,
    return
  }
  func.func @transform_0(%arg0: i32) -> (i32, i32) {
    %c0_i32 = arith.constant 0 : i32
    %c0_i32_0 = arith.constant 0 : i32
    return %arg0, %c0_i32 : i32, i32
  }
  func.func @transform_1(%arg0: i32) -> (i32, i32) {
    %c0_i32 = arith.constant 0 : i32
    %c0_i32_0 = arith.constant 0 : i32
    %c0_i32_1 = arith.constant 0 : i32
    return %c0_i32, %c0_i32_0 : i32, i32
  }
  func.func @transform_2(%arg0: i32) -> (i32, i32) {
    %c0_i32 = arith.constant 0 : i32
    %c0_i32_0 = arith.constant 0 : i32
    %c0_i32_1 = arith.constant 0 : i32
    return %c0_i32, %c0_i32_0 : i32, i32
  }
  func.func @transform_3(%arg0: i32) -> (i32, i32) {
    %c0_i32 = arith.constant 0 : i32
    %c0_i32_0 = arith.constant 0 : i32
    %c0_i32_1 = arith.constant 0 : i32
    return %c0_i32, %c0_i32_0 : i32, i32
  }
  func.func @transform_4(%arg0: i32) -> (i32, i32) {
    %c0_i32 = arith.constant 0 : i32
    %c0_i32_0 = arith.constant 0 : i32
    %c0_i32_1 = arith.constant 0 : i32
    return %c0_i32, %c0_i32_0 : i32, i32
  }
  func.func @transform_5(%arg0: i32) -> (i32, i32) {
    %c0_i32 = arith.constant 0 : i32
    %c0_i32_0 = arith.constant 0 : i32
    %c0_i32_1 = arith.constant 0 : i32
    return %c0_i32, %c0_i32_0 : i32, i32
  }
  func.func @transform_6(%arg0: i32) -> (i32, i32) {
    %c0_i32 = arith.constant 0 : i32
    %c0_i32_0 = arith.constant 0 : i32
    %c0_i32_1 = arith.constant 0 : i32
    return %c0_i32, %c0_i32_0 : i32, i32
  }
  func.func @transform_7(%arg0: i32) -> (i32, i32) {
    %c0_i32 = arith.constant 0 : i32
    %c0_i32_0 = arith.constant 0 : i32
    %c0_i32_1 = arith.constant 0 : i32
    return %c0_i32, %c0_i32_0 : i32, i32
  }
  func.func @transform_8(%arg0: i32) -> (i32, i32) {
    %c0_i32 = arith.constant 0 : i32
    %c0_i32_0 = arith.constant 0 : i32
    %c0_i32_1 = arith.constant 0 : i32
    return %c0_i32, %c0_i32_0 : i32, i32
  }
  func.func @transform_9(%arg0: i32) -> (i32, i32) {
    %c0_i32 = arith.constant 0 : i32
    %c0_i32_0 = arith.constant 0 : i32
    return %arg0, %c0_i32 : i32, i32
  }
}

</mosaic_0001>

<llo_original>
// kernel: tpu_custom_call.1
$region0: #{tpu_custom_call.1}
  #allocation0 [shape = 'u32[]', space=smem, size = 0x4, offset = 0x4, fixed_abs, tag = 'smem constant byte address 0x4 - core index']
  #allocation1 [shape = 'u32[144,128]{1,0:T(1,128)}', space=vmem, size = 0x12000, scoped, tag = 'internal scratch']
  %s0 = inlined_call_operand.vmem [shape: f32[16,2], index: 0, kind: input, shape index: {}]
  %s1 = inlined_call_operand.vmem [shape: f32[2,128], index: 1, kind: input, shape index: {}]
  %s2 = inlined_call_operand.vmem [shape: f32[1,128], index: 2, kind: input, shape index: {}]
  %s3 = inlined_call_operand.hbm [shape: f32[128,128], index: 3, kind: input, shape index: {}]
  %s4 = inlined_call_operand.vmem [shape: f32[1,128], index: 4, kind: input, shape index: {}]
  %s5 = inlined_call_operand.hbm [shape: bf16[128,512], index: 5, kind: input, shape index: {}]
  %s6 = inlined_call_operand.vmem [shape: f32[1,512], index: 6, kind: input, shape index: {}]
  %s7 = inlined_call_operand.hbm [shape: bf16[512,896], index: 7, kind: input, shape index: {}]
  %s8 = inlined_call_operand.vmem [shape: f32[1,896], index: 8, kind: input, shape index: {}]
  %s9 = inlined_call_operand.hbm [shape: f32[16,896], index: 9, kind: output, shape index: {}]
  %s10 = sld [smem:[#allocation0]]
  $region58: #{tpu_custom_call.1} parent=0
    _
  %s12 = ssub.s32 1, %s10
  %s13 = scalar_select 0, %s12, %s10
  $region1: #{tpu_custom_call.1} parent=0
    #allocation2 [shape = 'u8[65536]{0}', space=vmem, size = 0x10000, scoped, tag = 'input window, operand 3, single buffered']
    #allocation3 [shape = 's32[1]{0}', space=sflag, size = 0x4, scoped, tag = 'scoped memory for tpu_custom_call.1']
    #allocation4 [shape = 's32[1]{0}', space=sflag, size = 0x4, scoped, tag = 'scoped memory for tpu_custom_call.1']
    #allocation5 [shape = 'u8[131072]{0}', space=vmem, size = 0x20000, scoped, tag = 'input window, operand 5, single buffered']
    #allocation6 [shape = 's32[1]{0}', space=sflag, size = 0x4, scoped, tag = 'scoped memory for tpu_custom_call.1']
    #allocation7 [shape = 'u8[917504]{0}', space=vmem, size = 0xe0000, scoped, tag = 'input window, operand 7, single buffered']
    #allocation8 [shape = 'u8[57344]{0}', space=vmem, size = 0xe000, scoped, tag = 'output window, operand 0, single buffered']
    %14 = vsyncpa [#allocation3], 0
    %15 = vsyncpa [#allocation6], 0
    %16 = vsyncpa [#allocation4], 0
    // Predicated region
    $region2: #{tpu_custom_call.1} parent=1 // pred_check
      _
    $region3: #{tpu_custom_call.1} parent=1 // pred_check_branch
      %18 = sbr.rel (0) target = $region5
    $region4: #{tpu_custom_call.1} parent=1 // pred_region
      _
    $region5: #{tpu_custom_call.1} parent=1 // pred_fallthru
      _
    // Predicated region
    $region6: #{tpu_custom_call.1} parent=1 // pred_check
      _
    $region7: #{tpu_custom_call.1} parent=1 // pred_check_branch
      %20 = sbr.rel (0) target = $region9
    $region8: #{tpu_custom_call.1} parent=1 // pred_region
      _
    $region9: #{tpu_custom_call.1} parent=1 // pred_fallthru
      _
    // Predicated region
    $region10: #{tpu_custom_call.1} parent=1 // pred_check
      _
    $region11: #{tpu_custom_call.1} parent=1 // pred_check_branch
      %22 = sbr.rel (0) target = $region13
    $region12: #{tpu_custom_call.1} parent=1 // pred_region
      _
    $region13: #{tpu_custom_call.1} parent=1 // pred_fallthru
      _
    // Predicated region
    $region14: #{tpu_custom_call.1} parent=1 // pred_check
      _
    $region15: #{tpu_custom_call.1} parent=1 // pred_check_branch
      %24 = sbr.rel (0) target = $region17
    $region16: #{tpu_custom_call.1} parent=1 // pred_region
      %s26 = ssub.s32 2048, 2048
      %27 = vsyncadd [#allocation3], %s26
      %s28 = sshll.u32 [#allocation2], 4
      %s29 = int_to_ptr.vmem [resolvable:$true] %s28
      %34 = dma.hbm_to_vmem [thread:$0]  %s3, 2048, %s29, [#allocation3], 128, 128, 8
    $region17: #{tpu_custom_call.1} parent=1 // pred_fallthru
      _
    // Predicated region
    $region18: #{tpu_custom_call.1} parent=1 // pred_check
      _
    $region19: #{tpu_custom_call.1} parent=1 // pred_check_branch
      %36 = sbr.rel (0) target = $region21
    $region20: #{tpu_custom_call.1} parent=1 // pred_region
      _
    $region21: #{tpu_custom_call.1} parent=1 // pred_fallthru
      _
    // Predicated region
    $region22: #{tpu_custom_call.1} parent=1 // pred_check
      _
    $region23: #{tpu_custom_call.1} parent=1 // pred_check_branch
      %38 = sbr.rel (0) target = $region25
    $region24: #{tpu_custom_call.1} parent=1 // pred_region
      %s40 = ssub.s32 4096, 4096
      %41 = vsyncadd [#allocation6], %s40
      %s42 = sshll.u32 [#allocation5], 4
      %s43 = int_to_ptr.vmem [resolvable:$true] %s42
      %48 = dma.hbm_to_vmem [thread:$0]  %s5, 4096, %s43, [#allocation6], 256, 256, 16
    $region25: #{tpu_custom_call.1} parent=1 // pred_fallthru
      _
    // Predicated region
    $region26: #{tpu_custom_call.1} parent=1 // pred_check
      _
    $region27: #{tpu_custom_call.1} parent=1 // pred_check_branch
      %50 = sbr.rel (0) target = $region29
    $region28: #{tpu_custom_call.1} parent=1 // pred_region
      _
    $region29: #{tpu_custom_call.1} parent=1 // pred_fallthru
      _
    // Predicated region
    $region30: #{tpu_custom_call.1} parent=1 // pred_check
      _
    $region31: #{tpu_custom_call.1} parent=1 // pred_check_branch
      %52 = sbr.rel (0) target = $region33
    $region32: #{tpu_custom_call.1} parent=1 // pred_region
      %s54 = ssub.s32 28672, 28672
      %55 = vsyncadd [#allocation6], %s54
      %s56 = sshll.u32 [#allocation7], 4
      %s57 = int_to_ptr.vmem [resolvable:$true] %s56
      %62 = dma.hbm_to_vmem [thread:$0]  %s7, 28672, %s57, [#allocation6], 448, 448, 28
    $region33: #{tpu_custom_call.1} parent=1 // pred_fallthru
      _
    // Predicated region
    $region34: #{tpu_custom_call.1} parent=1 // pred_check
      _
    $region35: #{tpu_custom_call.1} parent=1 // pred_check_branch
      %64 = sbr.rel (0) target = $region37
    $region36: #{tpu_custom_call.1} parent=1 // pred_region
      _
    $region37: #{tpu_custom_call.1} parent=1 // pred_fallthru
      _
    // Predicated region
    $region38: #{tpu_custom_call.1} parent=1 // pred_check
      _
    $region39: #{tpu_custom_call.1} parent=1 // pred_check_branch
      %66 = sbr.rel (0) target = $region41
    $region40: #{tpu_custom_call.1} parent=1 // pred_region
      %67 = dma.done [#allocation3], 2048
    $region41: #{tpu_custom_call.1} parent=1 // pred_fallthru
      _
    // Predicated region
    $region42: #{tpu_custom_call.1} parent=1 // pred_check
      _
    $region43: #{tpu_custom_call.1} parent=1 // pred_check_branch
      %69 = sbr.rel (0) target = $region45
    $region44: #{tpu_custom_call.1} parent=1 // pred_region
      %70 = dma.done [#allocation6], 4096
    $region45: #{tpu_custom_call.1} parent=1 // pred_fallthru
      _
    // Predicated region
    $region46: #{tpu_custom_call.1} parent=1 // pred_check
      _
    $region47: #{tpu_custom_call.1} parent=1 // pred_check_branch
      %72 = sbr.rel (0) target = $region49
    $region48: #{tpu_custom_call.1} parent=1 // pred_region
      %73 = dma.done [#allocation6], 28672
    $region49: #{tpu_custom_call.1} parent=1 // pred_fallthru
      _
    %v75 = vld [vmem:[%s0] sm:$0xff]
    %v76 = vld [vmem:[%s0 + $0x8] sm:$0xff]
    %v77 = vld [vmem:[%s1] sm:$0x3]
    %v78 = vld [vmem:[%s2] sm:$0x1]
    %v80 = vlaneseq
    %v81 = vshrl.u32 %v80, 7
    %v82 = vsub.s32 0, %v81
    %v83 = vrot.slane %v78, %v82
    %vm85 = vcmask 15360
    %v87 = vsel %vm85, %v75, 0
    %v90 = vsel %vm85, %v76, 0
    %vm92 = vcmask 1041408
    %v94 = vsel %vm92, %v77, 0
    %96 = vmatprep.subr.mxu0 0.0
    %97 = vmatpush1.msra.mxu0 %v94
    %98 = vmatprep.subr.mxu0 0.0
    %99 = vmatpush1.msra.mxu0 0.0
    %100 = vmatprep.subr.mxu0 0.0
    %101 = vmatpush1.msra.mxu0 0.0
    %102 = vmatprep.subr.mxu0 0.0
    %103 = vmatpush1.msra.mxu0 0.0
    %104 = vmatprep.subr.mxu0 0.0
    %105 = vmatpush1.msra.mxu0 0.0
    %106 = vmatprep.subr.mxu0 0.0
    %107 = vmatpush1.msra.mxu0 0.0
    %108 = vmatprep.subr.mxu0 0.0
    %109 = vmatpush1.msra.mxu0 0.0
    %110 = vmatprep.subr.mxu0 0.0
    %111 = vmatpush1.msra.mxu0 0.0
    %112 = vmatprep.subr.mxu0 0.0
    %113 = vmatpush1.msra.mxu0 0.0
    %114 = vmatprep.subr.mxu0 0.0
    %115 = vmatpush1.msra.mxu0 0.0
    %116 = vmatprep.subr.mxu0 0.0
    %117 = vmatpush1.msra.mxu0 0.0
    %118 = vmatprep.subr.mxu0 0.0
    %119 = vmatpush1.msra.mxu0 0.0
    %120 = vmatprep.subr.mxu0 0.0
    %121 = vmatpush1.msra.mxu0 0.0
    %122 = vmatprep.subr.mxu0 0.0
    %123 = vmatpush1.msra.mxu0 0.0
    %124 = vmatprep.subr.mxu0 0.0
    %125 = vmatpush1.msra.mxu0 0.0
    %126 = vmatprep.subr.mxu0 0.0
    %127 = vmatpush1.msra.mxu0 0.0
    %128 = vmatprep.subr.mxu0 0.0
    %129 = vmatpush1.msra.mxu0 0.0
    %130 = vmatprep.subr.mxu0 0.0
    %131 = vmatpush1.msra.mxu0 0.0
    %132 = vmatprep.subr.mxu0 0.0
    %133 = vmatpush1.msra.mxu0 0.0
    %134 = vmatprep.subr.mxu0 0.0
    %135 = vmatpush1.msra.mxu0 0.0
    %136 = vmatprep.subr.mxu0 0.0
    %137 = vmatpush1.msra.mxu0 0.0
    %138 = vmatprep.subr.mxu0 0.0
    %139 = vmatpush1.msra.mxu0 0.0
    %140 = vmatprep.subr.mxu0 0.0
    %141 = vmatpush1.msra.mxu0 0.0
    %142 = vmatprep.subr.mxu0 0.0
    %143 = vmatpush1.msra.mxu0 0.0
    %144 = vmatprep.subr.mxu0 0.0
    %145 = vmatpush1.msra.mxu0 0.0
    %146 = vmatprep.subr.mxu0 0.0
    %147 = vmatpush1.msra.mxu0 0.0
    %148 = vmatprep.subr.mxu0 0.0
    %149 = vmatpush1.msra.mxu0 0.0
    %150 = vmatprep.subr.mxu0 0.0
    %151 = vmatpush1.msra.mxu0 0.0
    %152 = vmatprep.subr.mxu0 0.0
    %153 = vmatpush1.msra.mxu0 0.0
    %154 = vmatprep.subr.mxu0 0.0
    %155 = vmatpush1.msra.mxu0 0.0
    %156 = vmatprep.subr.mxu0 0.0
    %157 = vmatpush1.msra.mxu0 0.0
    %158 = vmatprep.subr.mxu0 0.0
    %159 = vmatpush1.msra.mxu0 0.0
    %160 = vmatprep.mubr.f32.mxu0 0.0
    %161 = vmatmul.mubr.f32.gmra.mrb[0].mxu0 %v87
    %v162 = vpop.f32.mrb[0].mxu0
    %v163 = vadd.f32 %v83, %v162
    %v164 = vpop.f32.mrb[0].mxu0
    %165 = vmatprep.mubr.f32.mxu0 0.0
    %166 = vmatmul.mubr.f32.gmra.mrb[0].mxu0 %v90
    %v167 = vpop.f32.mrb[0].mxu0
    %v168 = vadd.f32 %v83, %v167
    %v169 = vpop.f32.mrb[0].mxu0
    %170 = vdwg.mxu0
    %v171 = vmax.f32 %v163, 0.0
    %v172 = vmax.f32 %v168, 0.0
    %v173 = vld [vmem:[#allocation2] sm:$0xff]
    %v174 = vld [vmem:[#allocation2 + $0x8] sm:$0xff]
    %v175 = vld [vmem:[#allocation2 + $0x10] sm:$0xff]
    %v176 = vld [vmem:[#allocation2 + $0x18] sm:$0xff]
    %v177 = vld [vmem:[#allocation2 + $0x20] sm:$0xff]
    %v178 = vld [vmem:[#allocation2 + $0x28] sm:$0xff]
    %v179 = vld [vmem:[#allocation2 + $0x30] sm:$0xff]
    %v180 = vld [vmem:[#allocation2 + $0x38] sm:$0xff]
    %v181 = vld [vmem:[#allocation2 + $0x40] sm:$0xff]
    %v182 = vld [vmem:[#allocation2 + $0x48] sm:$0xff]
    %v183 = vld [vmem:[#allocation2 + $0x50] sm:$0xff]
    %v184 = vld [vmem:[#allocation2 + $0x58] sm:$0xff]
    %v185 = vld [vmem:[#allocation2 + $0x60] sm:$0xff]
    %v186 = vld [vmem:[#allocation2 + $0x68] sm:$0xff]
    %v187 = vld [vmem:[#allocation2 + $0x70] sm:$0xff]
    %v188 = vld [vmem:[#allocation2 + $0x78] sm:$0xff]
    %v189 = vld [vmem:[%s4] sm:$0x1]
    %v191 = vlaneseq
    %v192 = vshrl.u32 %v191, 7
    %v193 = vsub.s32 0, %v192
    %v194 = vrot.slane %v189, %v193
    %196 = vmatprep.subr.mxu0 0.0
    %197 = vmatpush1.msra.mxu0 %v173
    %198 = vmatprep.subr.mxu0 0.0
    %199 = vmatpush1.msra.mxu0 %v174
    %200 = vmatprep.subr.mxu0 0.0
    %201 = vmatpush1.msra.mxu0 %v175
    %202 = vmatprep.subr.mxu0 0.0
    %203 = vmatpush1.msra.mxu0 %v176
    %204 = vmatprep.subr.mxu0 0.0
    %205 = vmatpush1.msra.mxu0 %v177
    %206 = vmatprep.subr.mxu0 0.0
    %207 = vmatpush1.msra.mxu0 %v178
    %208 = vmatprep.subr.mxu0 0.0
    %209 = vmatpush1.msra.mxu0 %v179
    %210 = vmatprep.subr.mxu0 0.0
    %211 = vmatpush1.msra.mxu0 %v180
    %212 = vmatprep.subr.mxu0 0.0
    %213 = vmatpush1.msra.mxu0 %v181
    %214 = vmatprep.subr.mxu0 0.0
    %215 = vmatpush1.msra.mxu0 %v182
    %216 = vmatprep.subr.mxu0 0.0
    %217 = vmatpush1.msra.mxu0 %v183
    %218 = vmatprep.subr.mxu0 0.0
    %219 = vmatpush1.msra.mxu0 %v184
    %220 = vmatprep.subr.mxu0 0.0
    %221 = vmatpush1.msra.mxu0 %v185
    %222 = vmatprep.subr.mxu0 0.0
    %223 = vmatpush1.msra.mxu0 %v186
    %224 = vmatprep.subr.mxu0 0.0
    %225 = vmatpush1.msra.mxu0 %v187
    %226 = vmatprep.subr.mxu0 0.0
    %227 = vmatpush1.msra.mxu0 %v188
    %228 = vmatprep.subr.mxu0 0.0
    %229 = vmatpush1.msra.mxu0 0.0
    %230 = vmatprep.subr.mxu0 0.0
    %231 = vmatpush1.msra.mxu0 0.0
    %232 = vmatprep.subr.mxu0 0.0
    %233 = vmatpush1.msra.mxu0 0.0
    %234 = vmatprep.subr.mxu0 0.0
    %235 = vmatpush1.msra.mxu0 0.0
    %236 = vmatprep.subr.mxu0 0.0
    %237 = vmatpush1.msra.mxu0 0.0
    %238 = vmatprep.subr.mxu0 0.0
    %239 = vmatpush1.msra.mxu0 0.0
    %240 = vmatprep.subr.mxu0 0.0
    %241 = vmatpush1.msra.mxu0 0.0
    %242 = vmatprep.subr.mxu0 0.0
    %243 = vmatpush1.msra.mxu0 0.0
    %244 = vmatprep.subr.mxu0 0.0
    %245 = vmatpush1.msra.mxu0 0.0
    %246 = vmatprep.subr.mxu0 0.0
    %247 = vmatpush1.msra.mxu0 0.0
    %248 = vmatprep.subr.mxu0 0.0
    %249 = vmatpush1.msra.mxu0 0.0
    %250 = vmatprep.subr.mxu0 0.0
    %251 = vmatpush1.msra.mxu0 0.0
    %252 = vmatprep.subr.mxu0 0.0
    %253 = vmatpush1.msra.mxu0 0.0
    %254 = vmatprep.subr.mxu0 0.0
    %255 = vmatpush1.msra.mxu0 0.0
    %256 = vmatprep.subr.mxu0 0.0
    %257 = vmatpush1.msra.mxu0 0.0
    %258 = vmatprep.subr.mxu0 0.0
    %259 = vmatpush1.msra.mxu0 0.0
    %260 = vmatprep.mubr.f32.mxu0 0.0
    %261 = vmatmul.mubr.f32.gmra.mrb[0].mxu0 %v171
    %v262 = vpop.f32.mrb[0].mxu0
    %v263 = vadd.f32 %v194, %v262
    %v264 = vpop.f32.mrb[0].mxu0
    %265 = vmatprep.mubr.f32.mxu0 0.0
    %266 = vmatmul.mubr.f32.gmra.mrb[0].mxu0 %v172
    %v267 = vpop.f32.mrb[0].mxu0
    %v268 = vadd.f32 %v194, %v267
    %v269 = vpop.f32.mrb[0].mxu0
    %270 = vdwg.mxu0
    %v271 = vmax.f32 %v263, 0.0
    %v272 = vmax.f32 %v268, 0.0
    %v273 = vpack.c.bf16 %v272, %v271
    %v274 = vld [vmem:[#allocation5] sm:$0xff]
    %v275 = vld [vmem:[#allocation5 + $0x8] sm:$0xff]
    %v276 = vld [vmem:[#allocation5 + $0x10] sm:$0xff]
    %v277 = vld [vmem:[#allocation5 + $0x18] sm:$0xff]
    %v278 = vld [vmem:[#allocation5 + $0x20] sm:$0xff]
    %v279 = vld [vmem:[#allocation5 + $0x28] sm:$0xff]
    %v280 = vld [vmem:[#allocation5 + $0x30] sm:$0xff]
    %v281 = vld [vmem:[#allocation5 + $0x38] sm:$0xff]
    %v282 = vld [vmem:[#allocation5 + $0x40] sm:$0xff]
    %v283 = vld [vmem:[#allocation5 + $0x48] sm:$0xff]
    %v284 = vld [vmem:[#allocation5 + $0x50] sm:$0xff]
    %v285 = vld [vmem:[#allocation5 + $0x58] sm:$0xff]
    %v286 = vld [vmem:[#allocation5 + $0x60] sm:$0xff]
    %v287 = vld [vmem:[#allocation5 + $0x68] sm:$0xff]
    %v288 = vld [vmem:[#allocation5 + $0x70] sm:$0xff]
    %v289 = vld [vmem:[#allocation5 + $0x78] sm:$0xff]
    %v290 = vld [vmem:[#allocation5 + $0x80] sm:$0xff]
    %v291 = vld [vmem:[#allocation5 + $0x88] sm:$0xff]
    %v292 = vld [vmem:[#allocation5 + $0x90] sm:$0xff]
    %v293 = vld [vmem:[#allocation5 + $0x98] sm:$0xff]
    %v294 = vld [vmem:[#allocation5 + $0xa0] sm:$0xff]
    %v295 = vld [vmem:[#allocation5 + $0xa8] sm:$0xff]
    %v296 = vld [vmem:[#allocation5 + $0xb0] sm:$0xff]
    %v297 = vld [vmem:[#allocation5 + $0xb8] sm:$0xff]
    %v298 = vld [vmem:[#allocation5 + $0xc0] sm:$0xff]
    %v299 = vld [vmem:[#allocation5 + $0xc8] sm:$0xff]
    %v300 = vld [vmem:[#allocation5 + $0xd0] sm:$0xff]
    %v301 = vld [vmem:[#allocation5 + $0xd8] sm:$0xff]
    %v302 = vld [vmem:[#allocation5 + $0xe0] sm:$0xff]
    %v303 = vld [vmem:[#allocation5 + $0xe8] sm:$0xff]
    %v304 = vld [vmem:[#allocation5 + $0xf0] sm:$0xff]
    %v305 = vld [vmem:[#allocation5 + $0xf8] sm:$0xff]
    %v306 = vld [vmem:[%s6] sm:$0xf]
    %v308 = vlaneseq
    %v309 = vshrl.u32 %v308, 7
    %v310 = vsub.s32 0, %v309
    %v311 = vrot.slane %v306, %v310
    %v312 = vlaneseq
    %v313 = vshrl.u32 %v312, 7
    %v314 = vsub.s32 1, %v313
    %v315 = vrot.slane %v306, %v314
    %v316 = vlaneseq
    %v317 = vshrl.u32 %v316, 7
    %v318 = vsub.s32 2, %v317
    %v319 = vrot.slane %v306, %v318
    %v320 = vlaneseq
    %v321 = vshrl.u32 %v320, 7
    %v322 = vsub.s32 3, %v321
    %v323 = vrot.slane %v306, %v322
    %v360 = vunpack.c.l.b16 %v274
    %v361 = vunpack.c.h.b16 %v274
    %v362 = vunpack.c.l.b16 %v275
    %v363 = vunpack.c.h.b16 %v275
    %v364 = vunpack.c.l.b16 %v276
    %v365 = vunpack.c.h.b16 %v276
    %v366 = vunpack.c.l.b16 %v277
    %v367 = vunpack.c.h.b16 %v277
    %v368 = vunpack.c.l.b16 %v278
    %v369 = vunpack.c.h.b16 %v278
    %v370 = vunpack.c.l.b16 %v279
    %v371 = vunpack.c.h.b16 %v279
    %v372 = vunpack.c.l.b16 %v280
    %v373 = vunpack.c.h.b16 %v280
    %v374 = vunpack.c.l.b16 %v281
    %v375 = vunpack.c.h.b16 %v281
    %v376 = vunpack.c.l.b16 %v282
    %v377 = vunpack.c.h.b16 %v282
    %v378 = vunpack.c.l.b16 %v283
    %v379 = vunpack.c.h.b16 %v283
    %v380 = vunpack.c.l.b16 %v284
    %v381 = vunpack.c.h.b16 %v284
    %v382 = vunpack.c.l.b16 %v285
    %v383 = vunpack.c.h.b16 %v285
    %v384 = vunpack.c.l.b16 %v286
    %v385 = vunpack.c.h.b16 %v286
    %v386 = vunpack.c.l.b16 %v287
    %v387 = vunpack.c.h.b16 %v287
    %v388 = vunpack.c.l.b16 %v288
    %v389 = vunpack.c.h.b16 %v288
    %v390 = vunpack.c.l.b16 %v289
    %v391 = vunpack.c.h.b16 %v289
    %v392 = vunpack.c.l.b16 %v290
    %v393 = vunpack.c.h.b16 %v290
    %v394 = vunpack.c.l.b16 %v291
    %v395 = vunpack.c.h.b16 %v291
    %v396 = vunpack.c.l.b16 %v292
    %v397 = vunpack.c.h.b16 %v292
    %v398 = vunpack.c.l.b16 %v293
    %v399 = vunpack.c.h.b16 %v293
    %v400 = vunpack.c.l.b16 %v294
    %v401 = vunpack.c.h.b16 %v294
    %v402 = vunpack.c.l.b16 %v295
    %v403 = vunpack.c.h.b16 %v295
    %v404 = vunpack.c.l.b16 %v296
    %v405 = vunpack.c.h.b16 %v296
    %v406 = vunpack.c.l.b16 %v297
    %v407 = vunpack.c.h.b16 %v297
    %v408 = vunpack.c.l.b16 %v298
    %v409 = vunpack.c.h.b16 %v298
    %v410 = vunpack.c.l.b16 %v299
    %v411 = vunpack.c.h.b16 %v299
    %v412 = vunpack.c.l.b16 %v300
    %v413 = vunpack.c.h.b16 %v300
    %v414 = vunpack.c.l.b16 %v301
    %v415 = vunpack.c.h.b16 %v301
    %v416 = vunpack.c.l.b16 %v302
    %v417 = vunpack.c.h.b16 %v302
    %v418 = vunpack.c.l.b16 %v303
    %v419 = vunpack.c.h.b16 %v303
    %v420 = vunpack.c.l.b16 %v304
    %v421 = vunpack.c.h.b16 %v304
    %v422 = vunpack.c.l.b16 %v305
    %v423 = vunpack.c.h.b16 %v305
    %v424 = vpack.c.b16 %v364, %v360
    %v425 = vpack.c.b16 %v365, %v361
    %v426 = vpack.c.b16 %v366, %v362
    %v427 = vpack.c.b16 %v367, %v363
    %v428 = vpack.c.b16 %v372, %v368
    %v429 = vpack.c.b16 %v373, %v369
    %v430 = vpack.c.b16 %v374, %v370
    %v431 = vpack.c.b16 %v375, %v371
    %v432 = vpack.c.b16 %v380, %v376
    %v433 = vpack.c.b16 %v381, %v377
    %v434 = vpack.c.b16 %v382, %v378
    %v435 = vpack.c.b16 %v383, %v379
    %v436 = vpack.c.b16 %v388, %v384
    %v437 = vpack.c.b16 %v389, %v385
    %v438 = vpack.c.b16 %v390, %v386
    %v439 = vpack.c.b16 %v391, %v387
    %v440 = vpack.c.b16 %v396, %v392
    %v441 = vpack.c.b16 %v397, %v393
    %v442 = vpack.c.b16 %v398, %v394
    %v443 = vpack.c.b16 %v399, %v395
    %v444 = vpack.c.b16 %v404, %v400
    %v445 = vpack.c.b16 %v405, %v401
    %v446 = vpack.c.b16 %v406, %v402
    %v447 = vpack.c.b16 %v407, %v403
    %v448 = vpack.c.b16 %v412, %v408
    %v449 = vpack.c.b16 %v413, %v409
    %v450 = vpack.c.b16 %v414, %v410
    %v451 = vpack.c.b16 %v415, %v411
    %v452 = vpack.c.b16 %v420, %v416
    %v453 = vpack.c.b16 %v421, %v417
    %v454 = vpack.c.b16 %v422, %v418
    %v455 = vpack.c.b16 %v423, %v419
    %488 = vmatprep.subr.bf16.mxu0 %v425
    %489 = vmatpush1.bf16.msra.mxu0 %v424
    %490 = vmatprep.subr.bf16.mxu0 %v429
    %491 = vmatpush1.bf16.msra.mxu0 %v428
    %492 = vmatprep.subr.bf16.mxu0 %v433
    %493 = vmatpush1.bf16.msra.mxu0 %v432
    %494 = vmatprep.subr.bf16.mxu0 %v437
    %495 = vmatpush1.bf16.msra.mxu0 %v436
    %496 = vmatprep.subr.bf16.mxu0 %v441
    %497 = vmatpush1.bf16.msra.mxu0 %v440
    %498 = vmatprep.subr.bf16.mxu0 %v445
    %499 = vmatpush1.bf16.msra.mxu0 %v444
    %500 = vmatprep.subr.bf16.mxu0 %v449
    %501 = vmatpush1.bf16.msra.mxu0 %v448
    %502 = vmatprep.subr.bf16.mxu0 %v453
    %503 = vmatpush1.bf16.msra.mxu0 %v452
    %504 = vmatprep.subr.bf16.mxu0 0
    %505 = vmatpush1.bf16.msra.mxu0 0
    %506 = vmatprep.subr.bf16.mxu0 0
    %507 = vmatpush1.bf16.msra.mxu0 0
    %508 = vmatprep.subr.bf16.mxu0 0
    %509 = vmatpush1.bf16.msra.mxu0 0
    %510 = vmatprep.subr.bf16.mxu0 0
    %511 = vmatpush1.bf16.msra.mxu0 0
    %512 = vmatprep.subr.bf16.mxu0 0
    %513 = vmatpush1.bf16.msra.mxu0 0
    %514 = vmatprep.subr.bf16.mxu0 0
    %515 = vmatpush1.bf16.msra.mxu0 0
    %516 = vmatprep.subr.bf16.mxu0 0
    %517 = vmatpush1.bf16.msra.mxu0 0
    %518 = vmatprep.subr.bf16.mxu0 0
    %519 = vmatpush1.bf16.msra.mxu0 0
    %520 = vmatprep.mubr.bf16.mxu0 0
    %521 = vmatmul.mubr.bf16.gmra.mrb[0].mxu0 %v273
    %v522 = vpop.f32.mrb[0].mxu0
    %v523 = vadd.f32 %v311, %v522
    %v524 = vpop.f32.mrb[0].mxu0
    %v525 = vadd.f32 %v315, %v524
    %v526 = vpop.f32.mrb[0].mxu0
    %v527 = vadd.f32 %v311, %v526
    %v528 = vpop.f32.mrb[0].mxu0
    %v529 = vadd.f32 %v315, %v528
    %530 = vdwg.mxu0
    %531 = vmatprep.subr.bf16.mxu0 %v427
    %532 = vmatpush1.bf16.msra.mxu0 %v426
    %533 = vmatprep.subr.bf16.mxu0 %v431
    %534 = vmatpush1.bf16.msra.mxu0 %v430
    %535 = vmatprep.subr.bf16.mxu0 %v435
    %536 = vmatpush1.bf16.msra.mxu0 %v434
    %537 = vmatprep.subr.bf16.mxu0 %v439
    %538 = vmatpush1.bf16.msra.mxu0 %v438
    %539 = vmatprep.subr.bf16.mxu0 %v443
    %540 = vmatpush1.bf16.msra.mxu0 %v442
    %541 = vmatprep.subr.bf16.mxu0 %v447
    %542 = vmatpush1.bf16.msra.mxu0 %v446
    %543 = vmatprep.subr.bf16.mxu0 %v451
    %544 = vmatpush1.bf16.msra.mxu0 %v450
    %545 = vmatprep.subr.bf16.mxu0 %v455
    %546 = vmatpush1.bf16.msra.mxu0 %v454
    %547 = vmatprep.subr.bf16.mxu0 0
    %548 = vmatpush1.bf16.msra.mxu0 0
    %549 = vmatprep.subr.bf16.mxu0 0
    %550 = vmatpush1.bf16.msra.mxu0 0
    %551 = vmatprep.subr.bf16.mxu0 0
    %552 = vmatpush1.bf16.msra.mxu0 0
    %553 = vmatprep.subr.bf16.mxu0 0
    %554 = vmatpush1.bf16.msra.mxu0 0
    %555 = vmatprep.subr.bf16.mxu0 0
    %556 = vmatpush1.bf16.msra.mxu0 0
    %557 = vmatprep.subr.bf16.mxu0 0
    %558 = vmatpush1.bf16.msra.mxu0 0
    %559 = vmatprep.subr.bf16.mxu0 0
    %560 = vmatpush1.bf16.msra.mxu0 0
    %561 = vmatprep.subr.bf16.mxu0 0
    %562 = vmatpush1.bf16.msra.mxu0 0
    %563 = vmatprep.mubr.bf16.mxu0 0
    %564 = vmatmul.mubr.bf16.gmra.mrb[0].mxu0 %v273
    %v565 = vpop.f32.mrb[0].mxu0
    %v566 = vadd.f32 %v319, %v565
    %v567 = vpop.f32.mrb[0].mxu0
    %v568 = vadd.f32 %v323, %v567
    %v569 = vpop.f32.mrb[0].mxu0
    %v570 = vadd.f32 %v319, %v569
    %v571 = vpop.f32.mrb[0].mxu0
    %v572 = vadd.f32 %v323, %v571
    %573 = vdwg.mxu0
    %v574 = vmax.f32 %v523, 0.0
    %v575 = vmax.f32 %v525, 0.0
    %v576 = vmax.f32 %v566, 0.0
    %v577 = vmax.f32 %v568, 0.0
    %v578 = vmax.f32 %v527, 0.0
    %v579 = vmax.f32 %v529, 0.0
    %v580 = vmax.f32 %v570, 0.0
    %v581 = vmax.f32 %v572, 0.0
    %v582 = vpack.c.bf16 %v578, %v574
    %v583 = vpack.c.bf16 %v579, %v575
    %v584 = vpack.c.bf16 %v580, %v576
    %v585 = vpack.c.bf16 %v581, %v577
    %v586 = vld [vmem:[#allocation7] sm:$0xf]
    %v587 = vld [vmem:[#allocation7 + $0x1c] sm:$0xf]
    %v588 = vld [vmem:[#allocation7 + $0x38] sm:$0xf]
    %v589 = vld [vmem:[#allocation7 + $0x54] sm:$0xf]
    %v590 = vld [vmem:[#allocation7 + $0x70] sm:$0xf]
    %v591 = vld [vmem:[#allocation7 + $0x8c] sm:$0xf]
    %v592 = vld [vmem:[#allocation7 + $0xa8] sm:$0xf]
    %v593 = vld [vmem:[#allocation7 + $0xc4] sm:$0xf]
    %v594 = vld [vmem:[#allocation7 + $0xe0] sm:$0xf]
    %v595 = vld [vmem:[#allocation7 + $0xfc] sm:$0xf]
    %v596 = vld [vmem:[#allocation7 + $0x118] sm:$0xf]
    %v597 = vld [vmem:[#allocation7 + $0x134] sm:$0xf]
    %v598 = vld [vmem:[#allocation7 + $0x150] sm:$0xf]
    %v599 = vld [vmem:[#allocation7 + $0x16c] sm:$0xf]
    %v600 = vld [vmem:[#allocation7 + $0x188] sm:$0xf]
    %v601 = vld [vmem:[#allocation7 + $0x1a4] sm:$0xf]
    %v602 = vld [vmem:[#allocation7 + $0x1c0] sm:$0xf]
    %v603 = vld [vmem:[#allocation7 + $0x1dc] sm:$0xf]
    %v604 = vld [vmem:[#allocation7 + $0x1f8] sm:$0xf]
    %v605 = vld [vmem:[#allocation7 + $0x214] sm:$0xf]
    %v606 = vld [vmem:[#allocation7 + $0x230] sm:$0xf]
    %v607 = vld [vmem:[#allocation7 + $0x24c] sm:$0xf]
    %v608 = vld [vmem:[#allocation7 + $0x268] sm:$0xf]
    %v609 = vld [vmem:[#allocation7 + $0x284] sm:$0xf]
    %v610 = vld [vmem:[#allocation7 + $0x2a0] sm:$0xf]
    %v611 = vld [vmem:[#allocation7 + $0x2bc] sm:$0xf]
    %v612 = vld [vmem:[#allocation7 + $0x2d8] sm:$0xf]
    %v613 = vld [vmem:[#allocation7 + $0x2f4] sm:$0xf]
    %v614 = vld [vmem:[#allocation7 + $0x310] sm:$0xf]
    %v615 = vld [vmem:[#allocation7 + $0x32c] sm:$0xf]
    %v616 = vld [vmem:[#allocation7 + $0x348] sm:$0xf]
    %v617 = vld [vmem:[#allocation7 + $0x364] sm:$0xf]
    %v618 = vld [vmem:[#allocation7 + $0x380] sm:$0xf]
    %v619 = vld [vmem:[#allocation7 + $0x39c] sm:$0xf]
    %v620 = vld [vmem:[#allocation7 + $0x3b8] sm:$0xf]
    %v621 = vld [vmem:[#allocation7 + $0x3d4] sm:$0xf]
    %v622 = vld [vmem:[#allocation7 + $0x3f0] sm:$0xf]
    %v623 = vld [vmem:[#allocation7 + $0x40c] sm:$0xf]
    %v624 = vld [vmem:[#allocation7 + $0x428] sm:$0xf]
    %v625 = vld [vmem:[#allocation7 + $0x444] sm:$0xf]
    %v626 = vld [vmem:[#allocation7 + $0x460] sm:$0xf]
    %v627 = vld [vmem:[#allocation7 + $0x47c] sm:$0xf]
    %v628 = vld [vmem:[#allocation7 + $0x498] sm:$0xf]
    %v629 = vld [vmem:[#allocation7 + $0x4b4] sm:$0xf]
    %v630 = vld [vmem:[#allocation7 + $0x4d0] sm:$0xf]
    %v631 = vld [vmem:[#allocation7 + $0x4ec] sm:$0xf]
    %v632 = vld [vmem:[#allocation7 + $0x508] sm:$0xf]
    %v633 = vld [vmem:[#allocation7 + $0x524] sm:$0xf]
    %v634 = vld [vmem:[#allocation7 + $0x540] sm:$0xf]
    %v635 = vld [vmem:[#allocation7 + $0x55c] sm:$0xf]
    %v636 = vld [vmem:[#allocation7 + $0x578] sm:$0xf]
    %v637 = vld [vmem:[#allocation7 + $0x594] sm:$0xf]
    %v638 = vld [vmem:[#allocation7 + $0x5b0] sm:$0xf]
    %v639 = vld [vmem:[#allocation7 + $0x5cc] sm:$0xf]
    %v640 = vld [vmem:[#allocation7 + $0x5e8] sm:$0xf]
    %v641 = vld [vmem:[#allocation7 + $0x604] sm:$0xf]
    %v642 = vld [vmem:[#allocation7 + $0x620] sm:$0xf]
    %v643 = vld [vmem:[#allocation7 + $0x63c] sm:$0xf]
    %v644 = vld [vmem:[#allocation7 + $0x658] sm:$0xf]
    %v645 = vld [vmem:[#allocation7 + $0x674] sm:$0xf]
    %v646 = vld [vmem:[#allocation7 + $0x690] sm:$0xf]
    %v647 = vld [vmem:[#allocation7 + $0x6ac] sm:$0xf]
    %v648 = vld [vmem:[#allocation7 + $0x6c8] sm:$0xf]
    %v649 = vld [vmem:[#allocation7 + $0x6e4] sm:$0xf]
    %v650 = vld [vmem:[%s8] sm:$0x1]
    %v652 = vlaneseq
    %v653 = vshrl.u32 %v652, 7
    %v654 = vsub.s32 0, %v653
    %v655 = vrot.slane %v650, %v654
    %v721 = vunpack.c.l.b16 %v586
    %v722 = vunpack.c.l.b16 %v587
    %v723 = vunpack.c.l.b16 %v588
    %v724 = vunpack.c.l.b16 %v589
    %v725 = vunpack.c.l.b16 %v590
    %v726 = vunpack.c.l.b16 %v591
    %v727 = vunpack.c.l.b16 %v592
    %v728 = vunpack.c.l.b16 %v593
    %v729 = vunpack.c.l.b16 %v594
    %v730 = vunpack.c.l.b16 %v595
    %v731 = vunpack.c.l.b16 %v596
    %v732 = vunpack.c.l.b16 %v597
    %v733 = vunpack.c.l.b16 %v598
    %v734 = vunpack.c.l.b16 %v599
    %v735 = vunpack.c.l.b16 %v600
    %v736 = vunpack.c.l.b16 %v601
    %v737 = vunpack.c.l.b16 %v602
    %v738 = vunpack.c.l.b16 %v603
    %v739 = vunpack.c.l.b16 %v604
    %v740 = vunpack.c.l.b16 %v605
    %v741 = vunpack.c.l.b16 %v606
    %v742 = vunpack.c.l.b16 %v607
    %v743 = vunpack.c.l.b16 %v608
    %v744 = vunpack.c.l.b16 %v609
    %v745 = vunpack.c.l.b16 %v610
    %v746 = vunpack.c.l.b16 %v611
    %v747 = vunpack.c.l.b16 %v612
    %v748 = vunpack.c.l.b16 %v613
    %v749 = vunpack.c.l.b16 %v614
    %v750 = vunpack.c.l.b16 %v615
    %v751 = vunpack.c.l.b16 %v616
    %v752 = vunpack.c.l.b16 %v617
    %v753 = vunpack.c.l.b16 %v618
    %v754 = vunpack.c.l.b16 %v619
    %v755 = vunpack.c.l.b16 %v620
    %v756 = vunpack.c.l.b16 %v621
    %v757 = vunpack.c.l.b16 %v622
    %v758 = vunpack.c.l.b16 %v623
    %v759 = vunpack.c.l.b16 %v624
    %v760 = vunpack.c.l.b16 %v625
    %v761 = vunpack.c.l.b16 %v626
    %v762 = vunpack.c.l.b16 %v627
    %v763 = vunpack.c.l.b16 %v628
    %v764 = vunpack.c.l.b16 %v629
    %v765 = vunpack.c.l.b16 %v630
    %v766 = vunpack.c.l.b16 %v631
    %v767 = vunpack.c.l.b16 %v632
    %v768 = vunpack.c.l.b16 %v633
    %v769 = vunpack.c.l.b16 %v634
    %v770 = vunpack.c.l.b16 %v635
    %v771 = vunpack.c.l.b16 %v636
    %v772 = vunpack.c.l.b16 %v637
    %v773 = vunpack.c.l.b16 %v638
    %v774 = vunpack.c.l.b16 %v639
    %v775 = vunpack.c.l.b16 %v640
    %v776 = vunpack.c.l.b16 %v641
    %v777 = vunpack.c.l.b16 %v642
    %v778 = vunpack.c.l.b16 %v643
    %v779 = vunpack.c.l.b16 %v644
    %v780 = vunpack.c.l.b16 %v645
    %v781 = vunpack.c.l.b16 %v646
    %v782 = vunpack.c.l.b16 %v647
    %v783 = vunpack.c.l.b16 %v648
    %v784 = vunpack.c.l.b16 %v649
    %v785 = vpack.c.b16 %v722, %v721
    %v786 = vpack.c.b16 %v724, %v723
    %v787 = vpack.c.b16 %v726, %v725
    %v788 = vpack.c.b16 %v728, %v727
    %v789 = vpack.c.b16 %v730, %v729
    %v790 = vpack.c.b16 %v732, %v731
    %v791 = vpack.c.b16 %v734, %v733
    %v792 = vpack.c.b16 %v736, %v735
    %v793 = vpack.c.b16 %v738, %v737
    %v794 = vpack.c.b16 %v740, %v739
    %v795 = vpack.c.b16 %v742, %v741
    %v796 = vpack.c.b16 %v744, %v743
    %v797 = vpack.c.b16 %v746, %v745
    %v798 = vpack.c.b16 %v748, %v747
    %v799 = vpack.c.b16 %v750, %v749
    %v800 = vpack.c.b16 %v752, %v751
    %v801 = vpack.c.b16 %v754, %v753
    %v802 = vpack.c.b16 %v756, %v755
    %v803 = vpack.c.b16 %v758, %v757
    %v804 = vpack.c.b16 %v760, %v759
    %v805 = vpack.c.b16 %v762, %v761
    %v806 = vpack.c.b16 %v764, %v763
    %v807 = vpack.c.b16 %v766, %v765
    %v808 = vpack.c.b16 %v768, %v767
    %v809 = vpack.c.b16 %v770, %v769
    %v810 = vpack.c.b16 %v772, %v771
    %v811 = vpack.c.b16 %v774, %v773
    %v812 = vpack.c.b16 %v776, %v775
    %v813 = vpack.c.b16 %v778, %v777
    %v814 = vpack.c.b16 %v780, %v779
    %v815 = vpack.c.b16 %v782, %v781
    %v816 = vpack.c.b16 %v784, %v783
    %849 = vmatprep.subr.bf16.mxu0 0
    %850 = vmatpush1.bf16.msra.mxu0 %v785
    %851 = vmatprep.subr.bf16.mxu0 0
    %852 = vmatpush1.bf16.msra.mxu0 %v786
    %853 = vmatprep.subr.bf16.mxu0 0
    %854 = vmatpush1.bf16.msra.mxu0 %v787
    %855 = vmatprep.subr.bf16.mxu0 0
    %856 = vmatpush1.bf16.msra.mxu0 %v788
    %857 = vmatprep.subr.bf16.mxu0 0
    %858 = vmatpush1.bf16.msra.mxu0 %v789
    %859 = vmatprep.subr.bf16.mxu0 0
    %860 = vmatpush1.bf16.msra.mxu0 %v790
    %861 = vmatprep.subr.bf16.mxu0 0
    %862 = vmatpush1.bf16.msra.mxu0 %v791
    %863 = vmatprep.subr.bf16.mxu0 0
    %864 = vmatpush1.bf16.msra.mxu0 %v792
    %865 = vmatprep.subr.bf16.mxu0 0
    %866 = vmatpush1.bf16.msra.mxu0 %v793
    %867 = vmatprep.subr.bf16.mxu0 0
    %868 = vmatpush1.bf16.msra.mxu0 %v794
    %869 = vmatprep.subr.bf16.mxu0 0
    %870 = vmatpush1.bf16.msra.mxu0 %v795
    %871 = vmatprep.subr.bf16.mxu0 0
    %872 = vmatpush1.bf16.msra.mxu0 %v796
    %873 = vmatprep.subr.bf16.mxu0 0
    %874 = vmatpush1.bf16.msra.mxu0 %v797
    %875 = vmatprep.subr.bf16.mxu0 0
    %876 = vmatpush1.bf16.msra.mxu0 %v798
    %877 = vmatprep.subr.bf16.mxu0 0
    %878 = vmatpush1.bf16.msra.mxu0 %v799
    %879 = vmatprep.subr.bf16.mxu0 0
    %880 = vmatpush1.bf16.msra.mxu0 %v800
    %881 = vmatprep.mubr.bf16.mxu0 %v583
    %882 = vmatmul.mubr.bf16.gmra.mrb[0].mxu0 %v582
    %v883 = vpop.f32.mrb[0].mxu0
    %v884 = vadd.f32 %v655, %v883
    %v885 = vpop.f32.mrb[0].mxu0
    %v886 = vpop.f32.mrb[0].mxu0
    %v887 = vadd.f32 %v655, %v886
    %v888 = vpop.f32.mrb[0].mxu0
    %889 = vdwg.mxu0
    %890 = vmatprep.subr.bf16.mxu0 0
    %891 = vmatpush1.bf16.msra.mxu0 %v801
    %892 = vmatprep.subr.bf16.mxu0 0
    %893 = vmatpush1.bf16.msra.mxu0 %v802
    %894 = vmatprep.subr.bf16.mxu0 0
    %895 = vmatpush1.bf16.msra.mxu0 %v803
    %896 = vmatprep.subr.bf16.mxu0 0
    %897 = vmatpush1.bf16.msra.mxu0 %v804
    %898 = vmatprep.subr.bf16.mxu0 0
    %899 = vmatpush1.bf16.msra.mxu0 %v805
    %900 = vmatprep.subr.bf16.mxu0 0
    %901 = vmatpush1.bf16.msra.mxu0 %v806
    %902 = vmatprep.subr.bf16.mxu0 0
    %903 = vmatpush1.bf16.msra.mxu0 %v807
    %904 = vmatprep.subr.bf16.mxu0 0
    %905 = vmatpush1.bf16.msra.mxu0 %v808
    %906 = vmatprep.subr.bf16.mxu0 0
    %907 = vmatpush1.bf16.msra.mxu0 %v809
    %908 = vmatprep.subr.bf16.mxu0 0
    %909 = vmatpush1.bf16.msra.mxu0 %v810
    %910 = vmatprep.subr.bf16.mxu0 0
    %911 = vmatpush1.bf16.msra.mxu0 %v811
    %912 = vmatprep.subr.bf16.mxu0 0
    %913 = vmatpush1.bf16.msra.mxu0 %v812
    %914 = vmatprep.subr.bf16.mxu0 0
    %915 = vmatpush1.bf16.msra.mxu0 %v813
    %916 = vmatprep.subr.bf16.mxu0 0
    %917 = vmatpush1.bf16.msra.mxu0 %v814
    %918 = vmatprep.subr.bf16.mxu0 0
    %919 = vmatpush1.bf16.msra.mxu0 %v815
    %920 = vmatprep.subr.bf16.mxu0 0
    %921 = vmatpush1.bf16.msra.mxu0 %v816
    %922 = vmatprep.mubr.bf16.mxu0 %v585
    %923 = vmatmul.mubr.bf16.gmra.mrb[0].mxu0 %v584
    %v924 = vpop.f32.mrb[0].mxu0
    %v925 = vadd.f32 %v884, %v924
    %v926 = vpop.f32.mrb[0].mxu0
    %v927 = vpop.f32.mrb[0].mxu0
    %v928 = vadd.f32 %v887, %v927
    %v929 = vpop.f32.mrb[0].mxu0
    %930 = vdwg.mxu0
    %v931 = vtanh.pop %v925
    %v932 = vtanh.pop %v928
    %933 = vst [vmem:[#allocation8] sm:$0xff] %v931
    %934 = vst [vmem:[#allocation8 + $0x38] sm:$0xff] %v932
    %v935 = vld [vmem:[#allocation7 + $0x4] sm:$0xf]
    %v936 = vld [vmem:[#allocation7 + $0x20] sm:$0xf]
    %v937 = vld [vmem:[#allocation7 + $0x3c] sm:$0xf]
    %v938 = vld [vmem:[#allocation7 + $0x58] sm:$0xf]
    %v939 = vld [vmem:[#allocation7 + $0x74] sm:$0xf]
    %v940 = vld [vmem:[#allocation7 + $0x90] sm:$0xf]
    %v941 = vld [vmem:[#allocation7 + $0xac] sm:$0xf]
    %v942 = vld [vmem:[#allocation7 + $0xc8] sm:$0xf]
    %v943 = vld [vmem:[#allocation7 + $0xe4] sm:$0xf]
    %v944 = vld [vmem:[#allocation7 + $0x100] sm:$0xf]
    %v945 = vld [vmem:[#allocation7 + $0x11c] sm:$0xf]
    %v946 = vld [vmem:[#allocation7 + $0x138] sm:$0xf]
    %v947 = vld [vmem:[#allocation7 + $0x154] sm:$0xf]
    %v948 = vld [vmem:[#allocation7 + $0x170] sm:$0xf]
    %v949 = vld [vmem:[#allocation7 + $0x18c] sm:$0xf]
    %v950 = vld [vmem:[#allocation7 + $0x1a8] sm:$0xf]
    %v951 = vld [vmem:[#allocation7 + $0x1c4] sm:$0xf]
    %v952 = vld [vmem:[#allocation7 + $0x1e0] sm:$0xf]
    %v953 = vld [vmem:[#allocation7 + $0x1fc] sm:$0xf]
    %v954 = vld [vmem:[#allocation7 + $0x218] sm:$0xf]
    %v955 = vld [vmem:[#allocation7 + $0x234] sm:$0xf]
    %v956 = vld [vmem:[#allocation7 + $0x250] sm:$0xf]
    %v957 = vld [vmem:[#allocation7 + $0x26c] sm:$0xf]
    %v958 = vld [vmem:[#allocation7 + $0x288] sm:$0xf]
    %v959 = vld [vmem:[#allocation7 + $0x2a4] sm:$0xf]
    %v960 = vld [vmem:[#allocation7 + $0x2c0] sm:$0xf]
    %v961 = vld [vmem:[#allocation7 + $0x2dc] sm:$0xf]
    %v962 = vld [vmem:[#allocation7 + $0x2f8] sm:$0xf]
    %v963 = vld [vmem:[#allocation7 + $0x314] sm:$0xf]
    %v964 = vld [vmem:[#allocation7 + $0x330] sm:$0xf]
    %v965 = vld [vmem:[#allocation7 + $0x34c] sm:$0xf]
    %v966 = vld [vmem:[#allocation7 + $0x368] sm:$0xf]
    %v967 = vld [vmem:[#allocation7 + $0x384] sm:$0xf]
    %v968 = vld [vmem:[#allocation7 + $0x3a0] sm:$0xf]
    %v969 = vld [vmem:[#allocation7 + $0x3bc] sm:$0xf]
    %v970 = vld [vmem:[#allocation7 + $0x3d8] sm:$0xf]
    %v971 = vld [vmem:[#allocation7 + $0x3f4] sm:$0xf]
    %v972 = vld [vmem:[#allocation7 + $0x410] sm:$0xf]
    %v973 = vld [vmem:[#allocation7 + $0x42c] sm:$0xf]
    %v974 = vld [vmem:[#allocation7 + $0x448] sm:$0xf]
    %v975 = vld [vmem:[#allocation7 + $0x464] sm:$0xf]
    %v976 = vld [vmem:[#allocation7 + $0x480] sm:$0xf]
    %v977 = vld [vmem:[#allocation7 + $0x49c] sm:$0xf]
    %v978 = vld [vmem:[#allocation7 + $0x4b8] sm:$0xf]
    %v979 = vld [vmem:[#allocation7 + $0x4d4] sm:$0xf]
    %v980 = vld [vmem:[#allocation7 + $0x4f0] sm:$0xf]
    %v981 = vld [vmem:[#allocation7 + $0x50c] sm:$0xf]
    %v982 = vld [vmem:[#allocation7 + $0x528] sm:$0xf]
    %v983 = vld [vmem:[#allocation7 + $0x544] sm:$0xf]
    %v984 = vld [vmem:[#allocation7 + $0x560] sm:$0xf]
    %v985 = vld [vmem:[#allocation7 + $0x57c] sm:$0xf]
    %v986 = vld [vmem:[#allocation7 + $0x598] sm:$0xf]
    %v987 = vld [vmem:[#allocation7 + $0x5b4] sm:$0xf]
    %v988 = vld [vmem:[#allocation7 + $0x5d0] sm:$0xf]
    %v989 = vld [vmem:[#allocation7 + $0x5ec] sm:$0xf]
    %v990 = vld [vmem:[#allocation7 + $0x608] sm:$0xf]
    %v991 = vld [vmem:[#allocation7 + $0x624] sm:$0xf]
    %v992 = vld [vmem:[#allocation7 + $0x640] sm:$0xf]
    %v993 = vld [vmem:[#allocation7 + $0x65c] sm:$0xf]
    %v994 = vld [vmem:[#allocation7 + $0x678] sm:$0xf]
    %v995 = vld [vmem:[#allocation7 + $0x694] sm:$0xf]
    %v996 = vld [vmem:[#allocation7 + $0x6b0] sm:$0xf]
    %v997 = vld [vmem:[#allocation7 + $0x6cc] sm:$0xf]
    %v998 = vld [vmem:[#allocation7 + $0x6e8] sm:$0xf]
    %v999 = vld [vmem:[%s8 + $0x1] sm:$0x1]
    %v1001 = vlaneseq
    %v1002 = vshrl.u32 %v1001, 7
    %v1003 = vsub.s32 0, %v1002
    %v1004 = vrot.slane %v999, %v1003
    %v1070 = vunpack.c.l.b16 %v935
    %v1071 = vunpack.c.l.b16 %v936
    %v1072 = vunpack.c.l.b16 %v937
    %v1073 = vunpack.c.l.b16 %v938
    %v1074 = vunpack.c.l.b16 %v939
    %v1075 = vunpack.c.l.b16 %v940
    %v1076 = vunpack.c.l.b16 %v941
    %v1077 = vunpack.c.l.b16 %v942
    %v1078 = vunpack.c.l.b16 %v943
    %v1079 = vunpack.c.l.b16 %v944
    %v1080 = vunpack.c.l.b16 %v945
    %v1081 = vunpack.c.l.b16 %v946
    %v1082 = vunpack.c.l.b16 %v947
    %v1083 = vunpack.c.l.b16 %v948
    %v1084 = vunpack.c.l.b16 %v949
    %v1085 = vunpack.c.l.b16 %v950
    %v1086 = vunpack.c.l.b16 %v951
    %v1087 = vunpack.c.l.b16 %v952
    %v1088 = vunpack.c.l.b16 %v953
    %v1089 = vunpack.c.l.b16 %v954
    %v1090 = vunpack.c.l.b16 %v955
    %v1091 = vunpack.c.l.b16 %v956
    %v1092 = vunpack.c.l.b16 %v957
    %v1093 = vunpack.c.l.b16 %v958
    %v1094 = vunpack.c.l.b16 %v959
    %v1095 = vunpack.c.l.b16 %v960
    %v1096 = vunpack.c.l.b16 %v961
    %v1097 = vunpack.c.l.b16 %v962
    %v1098 = vunpack.c.l.b16 %v963
    %v1099 = vunpack.c.l.b16 %v964
    %v1100 = vunpack.c.l.b16 %v965
    %v1101 = vunpack.c.l.b16 %v966
    %v1102 = vunpack.c.l.b16 %v967
    %v1103 = vunpack.c.l.b16 %v968
    %v1104 = vunpack.c.l.b16 %v969
    %v1105 = vunpack.c.l.b16 %v970
    %v1106 = vunpack.c.l.b16 %v971
    %v1107 = vunpack.c.l.b16 %v972
    %v1108 = vunpack.c.l.b16 %v973
    %v1109 = vunpack.c.l.b16 %v974
    %v1110 = vunpack.c.l.b16 %v975
    %v1111 = vunpack.c.l.b16 %v976
    %v1112 = vunpack.c.l.b16 %v977
    %v1113 = vunpack.c.l.b16 %v978
    %v1114 = vunpack.c.l.b16 %v979
    %v1115 = vunpack.c.l.b16 %v980
    %v1116 = vunpack.c.l.b16 %v981
    %v1117 = vunpack.c.l.b16 %v982
    %v1118 = vunpack.c.l.b16 %v983
    %v1119 = vunpack.c.l.b16 %v984
    %v1120 = vunpack.c.l.b16 %v985
    %v1121 = vunpack.c.l.b16 %v986
    %v1122 = vunpack.c.l.b16 %v987
    %v1123 = vunpack.c.l.b16 %v988
    %v1124 = vunpack.c.l.b16 %v989
    %v1125 = vunpack.c.l.b16 %v990
    %v1126 = vunpack.c.l.b16 %v991
    %v1127 = vunpack.c.l.b16 %v992
    %v1128 = vunpack.c.l.b16 %v993
    %v1129 = vunpack.c.l.b16 %v994
    %v1130 = vunpack.c.l.b16 %v995
    %v1131 = vunpack.c.l.b16 %v996
    %v1132 = vunpack.c.l.b16 %v997
    %v1133 = vunpack.c.l.b16 %v998
    %v1134 = vpack.c.b16 %v1071, %v1070
    %v1135 = vpack.c.b16 %v1073, %v1072
    %v1136 = vpack.c.b16 %v1075, %v1074
    %v1137 = vpack.c.b16 %v1077, %v1076
    %v1138 = vpack.c.b16 %v1079, %v1078
    %v1139 = vpack.c.b16 %v1081, %v1080
    %v1140 = vpack.c.b16 %v1083, %v1082
    %v1141 = vpack.c.b16 %v1085, %v1084
    %v1142 = vpack.c.b16 %v1087, %v1086
    %v1143 = vpack.c.b16 %v1089, %v1088
    %v1144 = vpack.c.b16 %v1091, %v1090
    %v1145 = vpack.c.b16 %v1093, %v1092
    %v1146 = vpack.c.b16 %v1095, %v1094
    %v1147 = vpack.c.b16 %v1097, %v1096
    %v1148 = vpack.c.b16 %v1099, %v1098
    %v1149 = vpack.c.b16 %v1101, %v1100
    %v1150 = vpack.c.b16 %v1103, %v1102
    %v1151 = vpack.c.b16 %v1105, %v1104
    %v1152 = vpack.c.b16 %v1107, %v1106
    %v1153 = vpack.c.b16 %v1109, %v1108
    %v1154 = vpack.c.b16 %v1111, %v1110
    %v1155 = vpack.c.b16 %v1113, %v1112
    %v1156 = vpack.c.b16 %v1115, %v1114
    %v1157 = vpack.c.b16 %v1117, %v1116
    %v1158 = vpack.c.b16 %v1119, %v1118
    %v1159 = vpack.c.b16 %v1121, %v1120
    %v1160 = vpack.c.b16 %v1123, %v1122
    %v1161 = vpack.c.b16 %v1125, %v1124
    %v1162 = vpack.c.b16 %v1127, %v1126
    %v1163 = vpack.c.b16 %v1129, %v1128
    %v1164 = vpack.c.b16 %v1131, %v1130
    %v1165 = vpack.c.b16 %v1133, %v1132
    %1198 = vmatprep.subr.bf16.mxu0 0
    %1199 = vmatpush1.bf16.msra.mxu0 %v1134
    %1200 = vmatprep.subr.bf16.mxu0 0
    %1201 = vmatpush1.bf16.msra.mxu0 %v1135
    %1202 = vmatprep.subr.bf16.mxu0 0
    %1203 = vmatpush1.bf16.msra.mxu0 %v1136
    %1204 = vmatprep.subr.bf16.mxu0 0
    %1205 = vmatpush1.bf16.msra.mxu0 %v1137
    %1206 = vmatprep.subr.bf16.mxu0 0
    %1207 = vmatpush1.bf16.msra.mxu0 %v1138
    %1208 = vmatprep.subr.bf16.mxu0 0
    %1209 = vmatpush1.bf16.msra.mxu0 %v1139
    %1210 = vmatprep.subr.bf16.mxu0 0
    %1211 = vmatpush1.bf16.msra.mxu0 %v1140
    %1212 = vmatprep.subr.bf16.mxu0 0
    %1213 = vmatpush1.bf16.msra.mxu0 %v1141
    %1214 = vmatprep.subr.bf16.mxu0 0
    %1215 = vmatpush1.bf16.msra.mxu0 %v1142
    %1216 = vmatprep.subr.bf16.mxu0 0
    %1217 = vmatpush1.bf16.msra.mxu0 %v1143
    %1218 = vmatprep.subr.bf16.mxu0 0
    %1219 = vmatpush1.bf16.msra.mxu0 %v1144
    %1220 = vmatprep.subr.bf16.mxu0 0
    %1221 = vmatpush1.bf16.msra.mxu0 %v1145
    %1222 = vmatprep.subr.bf16.mxu0 0
    %1223 = vmatpush1.bf16.msra.mxu0 %v1146
    %1224 = vmatprep.subr.bf16.mxu0 0
    %1225 = vmatpush1.bf16.msra.mxu0 %v1147
    %1226 = vmatprep.subr.bf16.mxu0 0
    %1227 = vmatpush1.bf16.msra.mxu0 %v1148
    %1228 = vmatprep.subr.bf16.mxu0 0
    %1229 = vmatpush1.bf16.msra.mxu0 %v1149
    %1230 = vmatprep.mubr.bf16.mxu0 %v583
    %1231 = vmatmul.mubr.bf16.gmra.mrb[0].mxu0 %v582
    %v1232 = vpop.f32.mrb[0].mxu0
    %v1233 = vadd.f32 %v1004, %v1232
    %v1234 = vpop.f32.mrb[0].mxu0
    %v1235 = vpop.f32.mrb[0].mxu0
    %v1236 = vadd.f32 %v1004, %v1235
    %v1237 = vpop.f32.mrb[0].mxu0
    %1238 = vdwg.mxu0
    %1239 = vmatprep.subr.bf16.mxu0 0
    %1240 = vmatpush1.bf16.msra.mxu0 %v1150
    %1241 = vmatprep.subr.bf16.mxu0 0
    %1242 = vmatpush1.bf16.msra.mxu0 %v1151
    %1243 = vmatprep.subr.bf16.mxu0 0
    %1244 = vmatpush1.bf16.msra.mxu0 %v1152
    %1245 = vmatprep.subr.bf16.mxu0 0
    %1246 = vmatpush1.bf16.msra.mxu0 %v1153
    %1247 = vmatprep.subr.bf16.mxu0 0
    %1248 = vmatpush1.bf16.msra.mxu0 %v1154
    %1249 = vmatprep.subr.bf16.mxu0 0
    %1250 = vmatpush1.bf16.msra.mxu0 %v1155
    %1251 = vmatprep.subr.bf16.mxu0 0
    %1252 = vmatpush1.bf16.msra.mxu0 %v1156
    %1253 = vmatprep.subr.bf16.mxu0 0
    %1254 = vmatpush1.bf16.msra.mxu0 %v1157
    %1255 = vmatprep.subr.bf16.mxu0 0
    %1256 = vmatpush1.bf16.msra.mxu0 %v1158
    %1257 = vmatprep.subr.bf16.mxu0 0
    %1258 = vmatpush1.bf16.msra.mxu0 %v1159
    %1259 = vmatprep.subr.bf16.mxu0 0
    %1260 = vmatpush1.bf16.msra.mxu0 %v1160
    %1261 = vmatprep.subr.bf16.mxu0 0
    %1262 = vmatpush1.bf16.msra.mxu0 %v1161
    %1263 = vmatprep.subr.bf16.mxu0 0
    %1264 = vmatpush1.bf16.msra.mxu0 %v1162
    %1265 = vmatprep.subr.bf16.mxu0 0
    %1266 = vmatpush1.bf16.msra.mxu0 %v1163
    %1267 = vmatprep.subr.bf16.mxu0 0
    %1268 = vmatpush1.bf16.msra.mxu0 %v1164
    %1269 = vmatprep.subr.bf16.mxu0 0
    %1270 = vmatpush1.bf16.msra.mxu0 %v1165
    %1271 = vmatprep.mubr.bf16.mxu0 %v585
    %1272 = vmatmul.mubr.bf16.gmra.mrb[0].mxu0 %v584
    %v1273 = vpop.f32.mrb[0].mxu0
    %v1274 = vadd.f32 %v1233, %v1273
    %v1275 = vpop.f32.mrb[0].mxu0
    %v1276 = vpop.f32.mrb[0].mxu0
    %v1277 = vadd.f32 %v1236, %v1276
    %v1278 = vpop.f32.mrb[0].mxu0
    %1279 = vdwg.mxu0
    %v1280 = vtanh.pop %v1274
    %v1281 = vtanh.pop %v1277
    %1282 = vst [vmem:[#allocation8 + $0x8] sm:$0xff] %v1280
    %1283 = vst [vmem:[#allocation8 + $0x40] sm:$0xff] %v1281
    %v1284 = vld [vmem:[#allocation7 + $0x8] sm:$0xf]
    %v1285 = vld [vmem:[#allocation7 + $0x24] sm:$0xf]
    %v1286 = vld [vmem:[#allocation7 + $0x40] sm:$0xf]
    %v1287 = vld [vmem:[#allocation7 + $0x5c] sm:$0xf]
    %v1288 = vld [vmem:[#allocation7 + $0x78] sm:$0xf]
    %v1289 = vld [vmem:[#allocation7 + $0x94] sm:$0xf]
    %v1290 = vld [vmem:[#allocation7 + $0xb0] sm:$0xf]
    %v1291 = vld [vmem:[#allocation7 + $0xcc] sm:$0xf]
    %v1292 = vld [vmem:[#allocation7 + $0xe8] sm:$0xf]
    %v1293 = vld [vmem:[#allocation7 + $0x104] sm:$0xf]
    %v1294 = vld [vmem:[#allocation7 + $0x120] sm:$0xf]
    %v1295 = vld [vmem:[#allocation7 + $0x13c] sm:$0xf]
    %v1296 = vld [vmem:[#allocation7 + $0x158] sm:$0xf]
    %v1297 = vld [vmem:[#allocation7 + $0x174] sm:$0xf]
    %v1298 = vld [vmem:[#allocation7 + $0x190] sm:$0xf]
    %v1299 = vld [vmem:[#allocation7 + $0x1ac] sm:$0xf]
    %v1300 = vld [vmem:[#allocation7 + $0x1c8] sm:$0xf]
    %v1301 = vld [vmem:[#allocation7 + $0x1e4] sm:$0xf]
    %v1302 = vld [vmem:[#allocation7 + $0x200] sm:$0xf]
    %v1303 = vld [vmem:[#allocation7 + $0x21c] sm:$0xf]
    %v1304 = vld [vmem:[#allocation7 + $0x238] sm:$0xf]
    %v1305 = vld [vmem:[#allocation7 + $0x254] sm:$0xf]
    %v1306 = vld [vmem:[#allocation7 + $0x270] sm:$0xf]
    %v1307 = vld [vmem:[#allocation7 + $0x28c] sm:$0xf]
    %v1308 = vld [vmem:[#allocation7 + $0x2a8] sm:$0xf]
    %v1309 = vld [vmem:[#allocation7 + $0x2c4] sm:$0xf]
    %v1310 = vld [vmem:[#allocation7 + $0x2e0] sm:$0xf]
    %v1311 = vld [vmem:[#allocation7 + $0x2fc] sm:$0xf]
    %v1312 = vld [vmem:[#allocation7 + $0x318] sm:$0xf]
    %v1313 = vld [vmem:[#allocation7 + $0x334] sm:$0xf]
    %v1314 = vld [vmem:[#allocation7 + $0x350] sm:$0xf]
    %v1315 = vld [vmem:[#allocation7 + $0x36c] sm:$0xf]
    %v1316 = vld [vmem:[#allocation7 + $0x388] sm:$0xf]
    %v1317 = vld [vmem:[#allocation7 + $0x3a4] sm:$0xf]
    %v1318 = vld [vmem:[#allocation7 + $0x3c0] sm:$0xf]
    %v1319 = vld [vmem:[#allocation7 + $0x3dc] sm:$0xf]
    %v1320 = vld [vmem:[#allocation7 + $0x3f8] sm:$0xf]
    %v1321 = vld [vmem:[#allocation7 + $0x414] sm:$0xf]
    %v1322 = vld [vmem:[#allocation7 + $0x430] sm:$0xf]
    %v1323 = vld [vmem:[#allocation7 + $0x44c] sm:$0xf]
    %v1324 = vld [vmem:[#allocation7 + $0x468] sm:$0xf]
    %v1325 = vld [vmem:[#allocation7 + $0x484] sm:$0xf]
    %v1326 = vld [vmem:[#allocation7 + $0x4a0] sm:$0xf]
    %v1327 = vld [vmem:[#allocation7 + $0x4bc] sm:$0xf]
    %v1328 = vld [vmem:[#allocation7 + $0x4d8] sm:$0xf]
    %v1329 = vld [vmem:[#allocation7 + $0x4f4] sm:$0xf]
    %v1330 = vld [vmem:[#allocation7 + $0x510] sm:$0xf]
    %v1331 = vld [vmem:[#allocation7 + $0x52c] sm:$0xf]
    %v1332 = vld [vmem:[#allocation7 + $0x548] sm:$0xf]
    %v1333 = vld [vmem:[#allocation7 + $0x564] sm:$0xf]
    %v1334 = vld [vmem:[#allocation7 + $0x580] sm:$0xf]
    %v1335 = vld [vmem:[#allocation7 + $0x59c] sm:$0xf]
    %v1336 = vld [vmem:[#allocation7 + $0x5b8] sm:$0xf]
    %v1337 = vld [vmem:[#allocation7 + $0x5d4] sm:$0xf]
    %v1338 = vld [vmem:[#allocation7 + $0x5f0] sm:$0xf]
    %v1339 = vld [vmem:[#allocation7 + $0x60c] sm:$0xf]
    %v1340 = vld [vmem:[#allocation7 + $0x628] sm:$0xf]
    %v1341 = vld [vmem:[#allocation7 + $0x644] sm:$0xf]
    %v1342 = vld [vmem:[#allocation7 + $0x660] sm:$0xf]
    %v1343 = vld [vmem:[#allocation7 + $0x67c] sm:$0xf]
    %v1344 = vld [vmem:[#allocation7 + $0x698] sm:$0xf]
    %v1345 = vld [vmem:[#allocation7 + $0x6b4] sm:$0xf]
    %v1346 = vld [vmem:[#allocation7 + $0x6d0] sm:$0xf]
    %v1347 = vld [vmem:[#allocation7 + $0x6ec] sm:$0xf]
    %v1348 = vld [vmem:[%s8 + $0x2] sm:$0x1]
    %v1350 = vlaneseq
    %v1351 = vshrl.u32 %v1350, 7
    %v1352 = vsub.s32 0, %v1351
    %v1353 = vrot.slane %v1348, %v1352
    %v1419 = vunpack.c.l.b16 %v1284
    %v1420 = vunpack.c.l.b16 %v1285
    %v1421 = vunpack.c.l.b16 %v1286
    %v1422 = vunpack.c.l.b16 %v1287
    %v1423 = vunpack.c.l.b16 %v1288
    %v1424 = vunpack.c.l.b16 %v1289
    %v1425 = vunpack.c.l.b16 %v1290
    %v1426 = vunpack.c.l.b16 %v1291
    %v1427 = vunpack.c.l.b16 %v1292
    %v1428 = vunpack.c.l.b16 %v1293
    %v1429 = vunpack.c.l.b16 %v1294
    %v1430 = vunpack.c.l.b16 %v1295
    %v1431 = vunpack.c.l.b16 %v1296
    %v1432 = vunpack.c.l.b16 %v1297
    %v1433 = vunpack.c.l.b16 %v1298
    %v1434 = vunpack.c.l.b16 %v1299
    %v1435 = vunpack.c.l.b16 %v1300
    %v1436 = vunpack.c.l.b16 %v1301
    %v1437 = vunpack.c.l.b16 %v1302
    %v1438 = vunpack.c.l.b16 %v1303
    %v1439 = vunpack.c.l.b16 %v1304
    %v1440 = vunpack.c.l.b16 %v1305
    %v1441 = vunpack.c.l.b16 %v1306
    %v1442 = vunpack.c.l.b16 %v1307
    %v1443 = vunpack.c.l.b16 %v1308
    %v1444 = vunpack.c.l.b16 %v1309
    %v1445 = vunpack.c.l.b16 %v1310
    %v1446 = vunpack.c.l.b16 %v1311
    %v1447 = vunpack.c.l.b16 %v1312
    %v1448 = vunpack.c.l.b16 %v1313
    %v1449 = vunpack.c.l.b16 %v1314
    %v1450 = vunpack.c.l.b16 %v1315
    %v1451 = vunpack.c.l.b16 %v1316
    %v1452 = vunpack.c.l.b16 %v1317
    %v1453 = vunpack.c.l.b16 %v1318
    %v1454 = vunpack.c.l.b16 %v1319
    %v1455 = vunpack.c.l.b16 %v1320
    %v1456 = vunpack.c.l.b16 %v1321
    %v1457 = vunpack.c.l.b16 %v1322
    %v1458 = vunpack.c.l.b16 %v1323
    %v1459 = vunpack.c.l.b16 %v1324
    %v1460 = vunpack.c.l.b16 %v1325
    %v1461 = vunpack.c.l.b16 %v1326
    %v1462 = vunpack.c.l.b16 %v1327
    %v1463 = vunpack.c.l.b16 %v1328
    %v1464 = vunpack.c.l.b16 %v1329
    %v1465 = vunpack.c.l.b16 %v1330
    %v1466 = vunpack.c.l.b16 %v1331
    %v1467 = vunpack.c.l.b16 %v1332
    %v1468 = vunpack.c.l.b16 %v1333
    %v1469 = vunpack.c.l.b16 %v1334
    %v1470 = vunpack.c.l.b16 %v1335
    %v1471 = vunpack.c.l.b16 %v1336
    %v1472 = vunpack.c.l.b16 %v1337
    %v1473 = vunpack.c.l.b16 %v1338
    %v1474 = vunpack.c.l.b16 %v1339
    %v1475 = vunpack.c.l.b16 %v1340
    %v1476 = vunpack.c.l.b16 %v1341
    %v1477 = vunpack.c.l.b16 %v1342
    %v1478 = vunpack.c.l.b16 %v1343
    %v1479 = vunpack.c.l.b16 %v1344
    %v1480 = vunpack.c.l.b16 %v1345
    %v1481 = vunpack.c.l.b16 %v1346
    %v1482 = vunpack.c.l.b16 %v1347
    %v1483 = vpack.c.b16 %v1420, %v1419
    %v1484 = vpack.c.b16 %v1422, %v1421
    %v1485 = vpack.c.b16 %v1424, %v1423
    %v1486 = vpack.c.b16 %v1426, %v1425
    %v1487 = vpack.c.b16 %v1428, %v1427
    %v1488 = vpack.c.b16 %v1430, %v1429
    %v1489 = vpack.c.b16 %v1432, %v1431
    %v1490 = vpack.c.b16 %v1434, %v1433
    %v1491 = vpack.c.b16 %v1436, %v1435
    %v1492 = vpack.c.b16 %v1438, %v1437
    %v1493 = vpack.c.b16 %v1440, %v1439
    %v1494 = vpack.c.b16 %v1442, %v1441
    %v1495 = vpack.c.b16 %v1444, %v1443
    %v1496 = vpack.c.b16 %v1446, %v1445
    %v1497 = vpack.c.b16 %v1448, %v1447
    %v1498 = vpack.c.b16 %v1450, %v1449
    %v1499 = vpack.c.b16 %v1452, %v1451
    %v1500 = vpack.c.b16 %v1454, %v1453
    %v1501 = vpack.c.b16 %v1456, %v1455
    %v1502 = vpack.c.b16 %v1458, %v1457
    %v1503 = vpack.c.b16 %v1460, %v1459
    %v1504 = vpack.c.b16 %v1462, %v1461
    %v1505 = vpack.c.b16 %v1464, %v1463
    %v1506 = vpack.c.b16 %v1466, %v1465
    %v1507 = vpack.c.b16 %v1468, %v1467
    %v1508 = vpack.c.b16 %v1470, %v1469
    %v1509 = vpack.c.b16 %v1472, %v1471
    %v1510 = vpack.c.b16 %v1474, %v1473
    %v1511 = vpack.c.b16 %v1476, %v1475
    %v1512 = vpack.c.b16 %v1478, %v1477
    %v1513 = vpack.c.b16 %v1480, %v1479
    %v1514 = vpack.c.b16 %v1482, %v1481
    %1547 = vmatprep.subr.bf16.mxu0 0
    %1548 = vmatpush1.bf16.msra.mxu0 %v1483
    %1549 = vmatprep.subr.bf16.mxu0 0
    %1550 = vmatpush1.bf16.msra.mxu0 %v1484
    %1551 = vmatprep.subr.bf16.mxu0 0
    %1552 = vmatpush1.bf16.msra.mxu0 %v1485
    %1553 = vmatprep.subr.bf16.mxu0 0
    %1554 = vmatpush1.bf16.msra.mxu0 %v1486
    %1555 = vmatprep.subr.bf16.mxu0 0
    %1556 = vmatpush1.bf16.msra.mxu0 %v1487
    %1557 = vmatprep.subr.bf16.mxu0 0
    %1558 = vmatpush1.bf16.msra.mxu0 %v1488
    %1559 = vmatprep.subr.bf16.mxu0 0
    %1560 = vmatpush1.bf16.msra.mxu0 %v1489
    %1561 = vmatprep.subr.bf16.mxu0 0
    %1562 = vmatpush1.bf16.msra.mxu0 %v1490
    %1563 = vmatprep.subr.bf16.mxu0 0
    %1564 = vmatpush1.bf16.msra.mxu0 %v1491
    %1565 = vmatprep.subr.bf16.mxu0 0
    %1566 = vmatpush1.bf16.msra.mxu0 %v1492
    %1567 = vmatprep.subr.bf16.mxu0 0
    %1568 = vmatpush1.bf16.msra.mxu0 %v1493
    %1569 = vmatprep.subr.bf16.mxu0 0
    %1570 = vmatpush1.bf16.msra.mxu0 %v1494
    %1571 = vmatprep.subr.bf16.mxu0 0
    %1572 = vmatpush1.bf16.msra.mxu0 %v1495
    %1573 = vmatprep.subr.bf16.mxu0 0
    %1574 = vmatpush1.bf16.msra.mxu0 %v1496
    %1575 = vmatprep.subr.bf16.mxu0 0
    %1576 = vmatpush1.bf16.msra.mxu0 %v1497
    %1577 = vmatprep.subr.bf16.mxu0 0
    %1578 = vmatpush1.bf16.msra.mxu0 %v1498
    %1579 = vmatprep.mubr.bf16.mxu0 %v583
    %1580 = vmatmul.mubr.bf16.gmra.mrb[0].mxu0 %v582
    %v1581 = vpop.f32.mrb[0].mxu0
    %v1582 = vadd.f32 %v1353, %v1581
    %v1583 = vpop.f32.mrb[0].mxu0
    %v1584 = vpop.f32.mrb[0].mxu0
    %v1585 = vadd.f32 %v1353, %v1584
    %v1586 = vpop.f32.mrb[0].mxu0
    %1587 = vdwg.mxu0
    %1588 = vmatprep.subr.bf16.mxu0 0
    %1589 = vmatpush1.bf16.msra.mxu0 %v1499
    %1590 = vmatprep.subr.bf16.mxu0 0
    %1591 = vmatpush1.bf16.msra.mxu0 %v1500
    %1592 = vmatprep.subr.bf16.mxu0 0
    %1593 = vmatpush1.bf16.msra.mxu0 %v1501
    %1594 = vmatprep.subr.bf16.mxu0 0
    %1595 = vmatpush1.bf16.msra.mxu0 %v1502
    %1596 = vmatprep.subr.bf16.mxu0 0
    %1597 = vmatpush1.bf16.msra.mxu0 %v1503
    %1598 = vmatprep.subr.bf16.mxu0 0
    %1599 = vmatpush1.bf16.msra.mxu0 %v1504
    %1600 = vmatprep.subr.bf16.mxu0 0
    %1601 = vmatpush1.bf16.msra.mxu0 %v1505
    %1602 = vmatprep.subr.bf16.mxu0 0
    %1603 = vmatpush1.bf16.msra.mxu0 %v1506
    %1604 = vmatprep.subr.bf16.mxu0 0
    %1605 = vmatpush1.bf16.msra.mxu0 %v1507
    %1606 = vmatprep.subr.bf16.mxu0 0
    %1607 = vmatpush1.bf16.msra.mxu0 %v1508
    %1608 = vmatprep.subr.bf16.mxu0 0
    %1609 = vmatpush1.bf16.msra.mxu0 %v1509
    %1610 = vmatprep.subr.bf16.mxu0 0
    %1611 = vmatpush1.bf16.msra.mxu0 %v1510
    %1612 = vmatprep.subr.bf16.mxu0 0
    %1613 = vmatpush1.bf16.msra.mxu0 %v1511
    %1614 = vmatprep.subr.bf16.mxu0 0
    %1615 = vmatpush1.bf16.msra.mxu0 %v1512
    %1616 = vmatprep.subr.bf16.mxu0 0
    %1617 = vmatpush1.bf16.msra.mxu0 %v1513
    %1618 = vmatprep.subr.bf16.mxu0 0
    %1619 = vmatpush1.bf16.msra.mxu0 %v1514
    %1620 = vmatprep.mubr.bf16.mxu0 %v585
    %1621 = vmatmul.mubr.bf16.gmra.mrb[0].mxu0 %v584
    %v1622 = vpop.f32.mrb[0].mxu0
    %v1623 = vadd.f32 %v1582, %v1622
    %v1624 = vpop.f32.mrb[0].mxu0
    %v1625 = vpop.f32.mrb[0].mxu0
    %v1626 = vadd.f32 %v1585, %v1625
    %v1627 = vpop.f32.mrb[0].mxu0
    %1628 = vdwg.mxu0
    %v1629 = vtanh.pop %v1623
    %v1630 = vtanh.pop %v1626
    %1631 = vst [vmem:[#allocation8 + $0x10] sm:$0xff] %v1629
    %1632 = vst [vmem:[#allocation8 + $0x48] sm:$0xff] %v1630
    %v1633 = vld [vmem:[#allocation7 + $0xc] sm:$0xf]
    %v1634 = vld [vmem:[#allocation7 + $0x28] sm:$0xf]
    %v1635 = vld [vmem:[#allocation7 + $0x44] sm:$0xf]
    %v1636 = vld [vmem:[#allocation7 + $0x60] sm:$0xf]
    %v1637 = vld [vmem:[#allocation7 + $0x7c] sm:$0xf]
    %v1638 = vld [vmem:[#allocation7 + $0x98] sm:$0xf]
    %v1639 = vld [vmem:[#allocation7 + $0xb4] sm:$0xf]
    %v1640 = vld [vmem:[#allocation7 + $0xd0] sm:$0xf]
    %v1641 = vld [vmem:[#allocation7 + $0xec] sm:$0xf]
    %v1642 = vld [vmem:[#allocation7 + $0x108] sm:$0xf]
    %v1643 = vld [vmem:[#allocation7 + $0x124] sm:$0xf]
    %v1644 = vld [vmem:[#allocation7 + $0x140] sm:$0xf]
    %v1645 = vld [vmem:[#allocation7 + $0x15c] sm:$0xf]
    %v1646 = vld [vmem:[#allocation7 + $0x178] sm:$0xf]
    %v1647 = vld [vmem:[#allocation7 + $0x194] sm:$0xf]
    %v1648 = vld [vmem:[#allocation7 + $0x1b0] sm:$0xf]
    %v1649 = vld [vmem:[#allocation7 + $0x1cc] sm:$0xf]
    %v1650 = vld [vmem:[#allocation7 + $0x1e8] sm:$0xf]
    %v1651 = vld [vmem:[#allocation7 + $0x204] sm:$0xf]
    %v1652 = vld [vmem:[#allocation7 + $0x220] sm:$0xf]
    %v1653 = vld [vmem:[#allocation7 + $0x23c] sm:$0xf]
    %v1654 = vld [vmem:[#allocation7 + $0x258] sm:$0xf]
    %v1655 = vld [vmem:[#allocation7 + $0x274] sm:$0xf]
    %v1656 = vld [vmem:[#allocation7 + $0x290] sm:$0xf]
    %v1657 = vld [vmem:[#allocation7 + $0x2ac] sm:$0xf]
    %v1658 = vld [vmem:[#allocation7 + $0x2c8] sm:$0xf]
    %v1659 = vld [vmem:[#allocation7 + $0x2e4] sm:$0xf]
    %v1660 = vld [vmem:[#allocation7 + $0x300] sm:$0xf]
    %v1661 = vld [vmem:[#allocation7 + $0x31c] sm:$0xf]
    %v1662 = vld [vmem:[#allocation7 + $0x338] sm:$0xf]
    %v1663 = vld [vmem:[#allocation7 + $0x354] sm:$0xf]
    %v1664 = vld [vmem:[#allocation7 + $0x370] sm:$0xf]
    %v1665 = vld [vmem:[#allocation7 + $0x38c] sm:$0xf]
    %v1666 = vld [vmem:[#allocation7 + $0x3a8] sm:$0xf]
    %v1667 = vld [vmem:[#allocation7 + $0x3c4] sm:$0xf]
    %v1668 = vld [vmem:[#allocation7 + $0x3e0] sm:$0xf]
    %v1669 = vld [vmem:[#allocation7 + $0x3fc] sm:$0xf]
    %v1670 = vld [vmem:[#allocation7 + $0x418] sm:$0xf]
    %v1671 = vld [vmem:[#allocation7 + $0x434] sm:$0xf]
    %v1672 = vld [vmem:[#allocation7 + $0x450] sm:$0xf]
    %v1673 = vld [vmem:[#allocation7 + $0x46c] sm:$0xf]
    %v1674 = vld [vmem:[#allocation7 + $0x488] sm:$0xf]
    %v1675 = vld [vmem:[#allocation7 + $0x4a4] sm:$0xf]
    %v1676 = vld [vmem:[#allocation7 + $0x4c0] sm:$0xf]
    %v1677 = vld [vmem:[#allocation7 + $0x4dc] sm:$0xf]
    %v1678 = vld [vmem:[#allocation7 + $0x4f8] sm:$0xf]
    %v1679 = vld [vmem:[#allocation7 + $0x514] sm:$0xf]
    %v1680 = vld [vmem:[#allocation7 + $0x530] sm:$0xf]
    %v1681 = vld [vmem:[#allocation7 + $0x54c] sm:$0xf]
    %v1682 = vld [vmem:[#allocation7 + $0x568] sm:$0xf]
    %v1683 = vld [vmem:[#allocation7 + $0x584] sm:$0xf]
    %v1684 = vld [vmem:[#allocation7 + $0x5a0] sm:$0xf]
    %v1685 = vld [vmem:[#allocation7 + $0x5bc] sm:$0xf]
    %v1686 = vld [vmem:[#allocation7 + $0x5d8] sm:$0xf]
    %v1687 = vld [vmem:[#allocation7 + $0x5f4] sm:$0xf]
    %v1688 = vld [vmem:[#allocation7 + $0x610] sm:$0xf]
    %v1689 = vld [vmem:[#allocation7 + $0x62c] sm:$0xf]
    %v1690 = vld [vmem:[#allocation7 + $0x648] sm:$0xf]
    %v1691 = vld [vmem:[#allocation7 + $0x664] sm:$0xf]
    %v1692 = vld [vmem:[#allocation7 + $0x680] sm:$0xf]
    %v1693 = vld [vmem:[#allocation7 + $0x69c] sm:$0xf]
    %v1694 = vld [vmem:[#allocation7 + $0x6b8] sm:$0xf]
    %v1695 = vld [vmem:[#allocation7 + $0x6d4] sm:$0xf]
    %v1696 = vld [vmem:[#allocation7 + $0x6f0] sm:$0xf]
    %v1697 = vld [vmem:[%s8 + $0x3] sm:$0x1]
    %v1699 = vlaneseq
    %v1700 = vshrl.u32 %v1699, 7
    %v1701 = vsub.s32 0, %v1700
    %v1702 = vrot.slane %v1697, %v1701
    %v1768 = vunpack.c.l.b16 %v1633
    %v1769 = vunpack.c.l.b16 %v1634
    %v1770 = vunpack.c.l.b16 %v1635
    %v1771 = vunpack.c.l.b16 %v1636
    %v1772 = vunpack.c.l.b16 %v1637
    %v1773 = vunpack.c.l.b16 %v1638
    %v1774 = vunpack.c.l.b16 %v1639
    %v1775 = vunpack.c.l.b16 %v1640
    %v1776 = vunpack.c.l.b16 %v1641
    %v1777 = vunpack.c.l.b16 %v1642
    %v1778 = vunpack.c.l.b16 %v1643
    %v1779 = vunpack.c.l.b16 %v1644
    %v1780 = vunpack.c.l.b16 %v1645
    %v1781 = vunpack.c.l.b16 %v1646
    %v1782 = vunpack.c.l.b16 %v1647
    %v1783 = vunpack.c.l.b16 %v1648
    %v1784 = vunpack.c.l.b16 %v1649
    %v1785 = vunpack.c.l.b16 %v1650
    %v1786 = vunpack.c.l.b16 %v1651
    %v1787 = vunpack.c.l.b16 %v1652
    %v1788 = vunpack.c.l.b16 %v1653
    %v1789 = vunpack.c.l.b16 %v1654
    %v1790 = vunpack.c.l.b16 %v1655
    %v1791 = vunpack.c.l.b16 %v1656
    %v1792 = vunpack.c.l.b16 %v1657
    %v1793 = vunpack.c.l.b16 %v1658
    %v1794 = vunpack.c.l.b16 %v1659
    %v1795 = vunpack.c.l.b16 %v1660
    %v1796 = vunpack.c.l.b16 %v1661
    %v1797 = vunpack.c.l.b16 %v1662
    %v1798 = vunpack.c.l.b16 %v1663
    %v1799 = vunpack.c.l.b16 %v1664
    %v1800 = vunpack.c.l.b16 %v1665
    %v1801 = vunpack.c.l.b16 %v1666
    %v1802 = vunpack.c.l.b16 %v1667
    %v1803 = vunpack.c.l.b16 %v1668
    %v1804 = vunpack.c.l.b16 %v1669
    %v1805 = vunpack.c.l.b16 %v1670
    %v1806 = vunpack.c.l.b16 %v1671
    %v1807 = vunpack.c.l.b16 %v1672
    %v1808 = vunpack.c.l.b16 %v1673
    %v1809 = vunpack.c.l.b16 %v1674
    %v1810 = vunpack.c.l.b16 %v1675
    %v1811 = vunpack.c.l.b16 %v1676
    %v1812 = vunpack.c.l.b16 %v1677
    %v1813 = vunpack.c.l.b16 %v1678
    %v1814 = vunpack.c.l.b16 %v1679
    %v1815 = vunpack.c.l.b16 %v1680
    %v1816 = vunpack.c.l.b16 %v1681
    %v1817 = vunpack.c.l.b16 %v1682
    %v1818 = vunpack.c.l.b16 %v1683
    %v1819 = vunpack.c.l.b16 %v1684
    %v1820 = vunpack.c.l.b16 %v1685
    %v1821 = vunpack.c.l.b16 %v1686
    %v1822 = vunpack.c.l.b16 %v1687
    %v1823 = vunpack.c.l.b16 %v1688
    %v1824 = vunpack.c.l.b16 %v1689
    %v1825 = vunpack.c.l.b16 %v1690
    %v1826 = vunpack.c.l.b16 %v1691
    %v1827 = vunpack.c.l.b16 %v1692
    %v1828 = vunpack.c.l.b16 %v1693
    %v1829 = vunpack.c.l.b16 %v1694
    %v1830 = vunpack.c.l.b16 %v1695
    %v1831 = vunpack.c.l.b16 %v1696
    %v1832 = vpack.c.b16 %v1769, %v1768
    %v1833 = vpack.c.b16 %v1771, %v1770
    %v1834 = vpack.c.b16 %v1773, %v1772
    %v1835 = vpack.c.b16 %v1775, %v1774
    %v1836 = vpack.c.b16 %v1777, %v1776
    %v1837 = vpack.c.b16 %v1779, %v1778
    %v1838 = vpack.c.b16 %v1781, %v1780
    %v1839 = vpack.c.b16 %v1783, %v1782
    %v1840 = vpack.c.b16 %v1785, %v1784
    %v1841 = vpack.c.b16 %v1787, %v1786
    %v1842 = vpack.c.b16 %v1789, %v1788
    %v1843 = vpack.c.b16 %v1791, %v1790
    %v1844 = vpack.c.b16 %v1793, %v1792
    %v1845 = vpack.c.b16 %v1795, %v1794
    %v1846 = vpack.c.b16 %v1797, %v1796
    %v1847 = vpack.c.b16 %v1799, %v1798
    %v1848 = vpack.c.b16 %v1801, %v1800
    %v1849 = vpack.c.b16 %v1803, %v1802
    %v1850 = vpack.c.b16 %v1805, %v1804
    %v1851 = vpack.c.b16 %v1807, %v1806
    %v1852 = vpack.c.b16 %v1809, %v1808
    %v1853 = vpack.c.b16 %v1811, %v1810
    %v1854 = vpack.c.b16 %v1813, %v1812
    %v1855 = vpack.c.b16 %v1815, %v1814
    %v1856 = vpack.c.b16 %v1817, %v1816
    %v1857 = vpack.c.b16 %v1819, %v1818
    %v1858 = vpack.c.b16 %v1821, %v1820
    %v1859 = vpack.c.b16 %v1823, %v1822
    %v1860 = vpack.c.b16 %v1825, %v1824
    %v1861 = vpack.c.b16 %v1827, %v1826
    %v1862 = vpack.c.b16 %v1829, %v1828
    %v1863 = vpack.c.b16 %v1831, %v1830
    %1896 = vmatprep.subr.bf16.mxu0 0
    %1897 = vmatpush1.bf16.msra.mxu0 %v1832
    %1898 = vmatprep.subr.bf16.mxu0 0
    %1899 = vmatpush1.bf16.msra.mxu0 %v1833
    %1900 = vmatprep.subr.bf16.mxu0 0
    %1901 = vmatpush1.bf16.msra.mxu0 %v1834
    %1902 = vmatprep.subr.bf16.mxu0 0
    %1903 = vmatpush1.bf16.msra.mxu0 %v1835
    %1904 = vmatprep.subr.bf16.mxu0 0
    %1905 = vmatpush1.bf16.msra.mxu0 %v1836
    %1906 = vmatprep.subr.bf16.mxu0 0
    %1907 = vmatpush1.bf16.msra.mxu0 %v1837
    %1908 = vmatprep.subr.bf16.mxu0 0
    %1909 = vmatpush1.bf16.msra.mxu0 %v1838
    %1910 = vmatprep.subr.bf16.mxu0 0
    %1911 = vmatpush1.bf16.msra.mxu0 %v1839
    %1912 = vmatprep.subr.bf16.mxu0 0
    %1913 = vmatpush1.bf16.msra.mxu0 %v1840
    %1914 = vmatprep.subr.bf16.mxu0 0
    %1915 = vmatpush1.bf16.msra.mxu0 %v1841
    %1916 = vmatprep.subr.bf16.mxu0 0
    %1917 = vmatpush1.bf16.msra.mxu0 %v1842
    %1918 = vmatprep.subr.bf16.mxu0 0
    %1919 = vmatpush1.bf16.msra.mxu0 %v1843
    %1920 = vmatprep.subr.bf16.mxu0 0
    %1921 = vmatpush1.bf16.msra.mxu0 %v1844
    %1922 = vmatprep.subr.bf16.mxu0 0
    %1923 = vmatpush1.bf16.msra.mxu0 %v1845
    %1924 = vmatprep.subr.bf16.mxu0 0
    %1925 = vmatpush1.bf16.msra.mxu0 %v1846
    %1926 = vmatprep.subr.bf16.mxu0 0
    %1927 = vmatpush1.bf16.msra.mxu0 %v1847
    %1928 = vmatprep.mubr.bf16.mxu0 %v583
    %1929 = vmatmul.mubr.bf16.gmra.mrb[0].mxu0 %v582
    %v1930 = vpop.f32.mrb[0].mxu0
    %v1931 = vadd.f32 %v1702, %v1930
    %v1932 = vpop.f32.mrb[0].mxu0
    %v1933 = vpop.f32.mrb[0].mxu0
    %v1934 = vadd.f32 %v1702, %v1933
    %v1935 = vpop.f32.mrb[0].mxu0
    %1936 = vdwg.mxu0
    %1937 = vmatprep.subr.bf16.mxu0 0
    %1938 = vmatpush1.bf16.msra.mxu0 %v1848
    %1939 = vmatprep.subr.bf16.mxu0 0
    %1940 = vmatpush1.bf16.msra.mxu0 %v1849
    %1941 = vmatprep.subr.bf16.mxu0 0
    %1942 = vmatpush1.bf16.msra.mxu0 %v1850
    %1943 = vmatprep.subr.bf16.mxu0 0
    %1944 = vmatpush1.bf16.msra.mxu0 %v1851
    %1945 = vmatprep.subr.bf16.mxu0 0
    %1946 = vmatpush1.bf16.msra.mxu0 %v1852
    %1947 = vmatprep.subr.bf16.mxu0 0
    %1948 = vmatpush1.bf16.msra.mxu0 %v1853
    %1949 = vmatprep.subr.bf16.mxu0 0
    %1950 = vmatpush1.bf16.msra.mxu0 %v1854
    %1951 = vmatprep.subr.bf16.mxu0 0
    %1952 = vmatpush1.bf16.msra.mxu0 %v1855
    %1953 = vmatprep.subr.bf16.mxu0 0
    %1954 = vmatpush1.bf16.msra.mxu0 %v1856
    %1955 = vmatprep.subr.bf16.mxu0 0
    %1956 = vmatpush1.bf16.msra.mxu0 %v1857
    %1957 = vmatprep.subr.bf16.mxu0 0
    %1958 = vmatpush1.bf16.msra.mxu0 %v1858
    %1959 = vmatprep.subr.bf16.mxu0 0
    %1960 = vmatpush1.bf16.msra.mxu0 %v1859
    %1961 = vmatprep.subr.bf16.mxu0 0
    %1962 = vmatpush1.bf16.msra.mxu0 %v1860
    %1963 = vmatprep.subr.bf16.mxu0 0
    %1964 = vmatpush1.bf16.msra.mxu0 %v1861
    %1965 = vmatprep.subr.bf16.mxu0 0
    %1966 = vmatpush1.bf16.msra.mxu0 %v1862
    %1967 = vmatprep.subr.bf16.mxu0 0
    %1968 = vmatpush1.bf16.msra.mxu0 %v1863
    %1969 = vmatprep.mubr.bf16.mxu0 %v585
    %1970 = vmatmul.mubr.bf16.gmra.mrb[0].mxu0 %v584
    %v1971 = vpop.f32.mrb[0].mxu0
    %v1972 = vadd.f32 %v1931, %v1971
    %v1973 = vpop.f32.mrb[0].mxu0
    %v1974 = vpop.f32.mrb[0].mxu0
    %v1975 = vadd.f32 %v1934, %v1974
    %v1976 = vpop.f32.mrb[0].mxu0
    %1977 = vdwg.mxu0
    %v1978 = vtanh.pop %v1972
    %v1979 = vtanh.pop %v1975
    %1980 = vst [vmem:[#allocation8 + $0x18] sm:$0xff] %v1978
    %1981 = vst [vmem:[#allocation8 + $0x50] sm:$0xff] %v1979
    %v1982 = vld [vmem:[#allocation7 + $0x10] sm:$0xf]
    %v1983 = vld [vmem:[#allocation7 + $0x2c] sm:$0xf]
    %v1984 = vld [vmem:[#allocation7 + $0x48] sm:$0xf]
    %v1985 = vld [vmem:[#allocation7 + $0x64] sm:$0xf]
    %v1986 = vld [vmem:[#allocation7 + $0x80] sm:$0xf]
    %v1987 = vld [vmem:[#allocation7 + $0x9c] sm:$0xf]
    %v1988 = vld [vmem:[#allocation7 + $0xb8] sm:$0xf]
    %v1989 = vld [vmem:[#allocation7 + $0xd4] sm:$0xf]
    %v1990 = vld [vmem:[#allocation7 + $0xf0] sm:$0xf]
    %v1991 = vld [vmem:[#allocation7 + $0x10c] sm:$0xf]
    %v1992 = vld [vmem:[#allocation7 + $0x128] sm:$0xf]
    %v1993 = vld [vmem:[#allocation7 + $0x144] sm:$0xf]
    %v1994 = vld [vmem:[#allocation7 + $0x160] sm:$0xf]
    %v1995 = vld [vmem:[#allocation7 + $0x17c] sm:$0xf]
    %v1996 = vld [vmem:[#allocation7 + $0x198] sm:$0xf]
    %v1997 = vld [vmem:[#allocation7 + $0x1b4] sm:$0xf]
    %v1998 = vld [vmem:[#allocation7 + $0x1d0] sm:$0xf]
    %v1999 = vld [vmem:[#allocation7 + $0x1ec] sm:$0xf]
    %v2000 = vld [vmem:[#allocation7 + $0x208] sm:$0xf]
    %v2001 = vld [vmem:[#allocation7 + $0x224] sm:$0xf]
    %v2002 = vld [vmem:[#allocation7 + $0x240] sm:$0xf]
    %v2003 = vld [vmem:[#allocation7 + $0x25c] sm:$0xf]
    %v2004 = vld [vmem:[#allocation7 + $0x278] sm:$0xf]
    %v2005 = vld [vmem:[#allocation7 + $0x294] sm:$0xf]
    %v2006 = vld [vmem:[#allocation7 + $0x2b0] sm:$0xf]
    %v2007 = vld [vmem:[#allocation7 + $0x2cc] sm:$0xf]
    %v2008 = vld [vmem:[#allocation7 + $0x2e8] sm:$0xf]
    %v2009 = vld [vmem:[#allocation7 + $0x304] sm:$0xf]
    %v2010 = vld [vmem:[#allocation7 + $0x320] sm:$0xf]
    %v2011 = vld [vmem:[#allocation7 + $0x33c] sm:$0xf]
    %v2012 = vld [vmem:[#allocation7 + $0x358] sm:$0xf]
    %v2013 = vld [vmem:[#allocation7 + $0x374] sm:$0xf]
    %v2014 = vld [vmem:[#allocation7 + $0x390] sm:$0xf]
    %v2015 = vld [vmem:[#allocation7 + $0x3ac] sm:$0xf]
    %v2016 = vld [vmem:[#allocation7 + $0x3c8] sm:$0xf]
    %v2017 = vld [vmem:[#allocation7 + $0x3e4] sm:$0xf]
    %v2018 = vld [vmem:[#allocation7 + $0x400] sm:$0xf]
    %v2019 = vld [vmem:[#allocation7 + $0x41c] sm:$0xf]
    %v2020 = vld [vmem:[#allocation7 + $0x438] sm:$0xf]
    %v2021 = vld [vmem:[#allocation7 + $0x454] sm:$0xf]
    %v2022 = vld [vmem:[#allocation7 + $0x470] sm:$0xf]
    %v2023 = vld [vmem:[#allocation7 + $0x48c] sm:$0xf]
    %v2024 = vld [vmem:[#allocation7 + $0x4a8] sm:$0xf]
    %v2025 = vld [vmem:[#allocation7 + $0x4c4] sm:$0xf]
    %v2026 = vld [vmem:[#allocation7 + $0x4e0] sm:$0xf]
    %v2027 = vld [vmem:[#allocation7 + $0x4fc] sm:$0xf]
    %v2028 = vld [vmem:[#allocation7 + $0x518] sm:$0xf]
    %v2029 = vld [vmem:[#allocation7 + $0x534] sm:$0xf]
    %v2030 = vld [vmem:[#allocation7 + $0x550] sm:$0xf]
    %v2031 = vld [vmem:[#allocation7 + $0x56c] sm:$0xf]
    %v2032 = vld [vmem:[#allocation7 + $0x588] sm:$0xf]
    %v2033 = vld [vmem:[#allocation7 + $0x5a4] sm:$0xf]
    %v2034 = vld [vmem:[#allocation7 + $0x5c0] sm:$0xf]
    %v2035 = vld [vmem:[#allocation7 + $0x5dc] sm:$0xf]
    %v2036 = vld [vmem:[#allocation7 + $0x5f8] sm:$0xf]
    %v2037 = vld [vmem:[#allocation7 + $0x614] sm:$0xf]
    %v2038 = vld [vmem:[#allocation7 + $0x630] sm:$0xf]
    %v2039 = vld [vmem:[#allocation7 + $0x64c] sm:$0xf]
    %v2040 = vld [vmem:[#allocation7 + $0x668] sm:$0xf]
    %v2041 = vld [vmem:[#allocation7 + $0x684] sm:$0xf]
    %v2042 = vld [vmem:[#allocation7 + $0x6a0] sm:$0xf]
    %v2043 = vld [vmem:[#allocation7 + $0x6bc] sm:$0xf]
    %v2044 = vld [vmem:[#allocation7 + $0x6d8] sm:$0xf]
    %v2045 = vld [vmem:[#allocation7 + $0x6f4] sm:$0xf]
    %v2046 = vld [vmem:[%s8 + $0x4] sm:$0x1]
    %v2048 = vlaneseq
    %v2049 = vshrl.u32 %v2048, 7
    %v2050 = vsub.s32 0, %v2049
    %v2051 = vrot.slane %v2046, %v2050
    %v2117 = vunpack.c.l.b16 %v1982
    %v2118 = vunpack.c.l.b16 %v1983
    %v2119 = vunpack.c.l.b16 %v1984
    %v2120 = vunpack.c.l.b16 %v1985
    %v2121 = vunpack.c.l.b16 %v1986
    %v2122 = vunpack.c.l.b16 %v1987
    %v2123 = vunpack.c.l.b16 %v1988
    %v2124 = vunpack.c.l.b16 %v1989
    %v2125 = vunpack.c.l.b16 %v1990
    %v2126 = vunpack.c.l.b16 %v1991
    %v2127 = vunpack.c.l.b16 %v1992
    %v2128 = vunpack.c.l.b16 %v1993
    %v2129 = vunpack.c.l.b16 %v1994
    %v2130 = vunpack.c.l.b16 %v1995
    %v2131 = vunpack.c.l.b16 %v1996
    %v2132 = vunpack.c.l.b16 %v1997
    %v2133 = vunpack.c.l.b16 %v1998
    %v2134 = vunpack.c.l.b16 %v1999
    %v2135 = vunpack.c.l.b16 %v2000
    %v2136 = vunpack.c.l.b16 %v2001
    %v2137 = vunpack.c.l.b16 %v2002
    %v2138 = vunpack.c.l.b16 %v2003
    %v2139 = vunpack.c.l.b16 %v2004
    %v2140 = vunpack.c.l.b16 %v2005
    %v2141 = vunpack.c.l.b16 %v2006
    %v2142 = vunpack.c.l.b16 %v2007
    %v2143 = vunpack.c.l.b16 %v2008
    %v2144 = vunpack.c.l.b16 %v2009
    %v2145 = vunpack.c.l.b16 %v2010
    %v2146 = vunpack.c.l.b16 %v2011
    %v2147 = vunpack.c.l.b16 %v2012
    %v2148 = vunpack.c.l.b16 %v2013
    %v2149 = vunpack.c.l.b16 %v2014
    %v2150 = vunpack.c.l.b16 %v2015
    %v2151 = vunpack.c.l.b16 %v2016
    %v2152 = vunpack.c.l.b16 %v2017
    %v2153 = vunpack.c.l.b16 %v2018
    %v2154 = vunpack.c.l.b16 %v2019
    %v2155 = vunpack.c.l.b16 %v2020
    %v2156 = vunpack.c.l.b16 %v2021
    %v2157 = vunpack.c.l.b16 %v2022
    %v2158 = vunpack.c.l.b16 %v2023
    %v2159 = vunpack.c.l.b16 %v2024
    %v2160 = vunpack.c.l.b16 %v2025
    %v2161 = vunpack.c.l.b16 %v2026
    %v2162 = vunpack.c.l.b16 %v2027
    %v2163 = vunpack.c.l.b16 %v2028
    %v2164 = vunpack.c.l.b16 %v2029
    %v2165 = vunpack.c.l.b16 %v2030
    %v2166 = vunpack.c.l.b16 %v2031
    %v2167 = vunpack.c.l.b16 %v2032
    %v2168 = vunpack.c.l.b16 %v2033
    %v2169 = vunpack.c.l.b16 %v2034
    %v2170 = vunpack.c.l.b16 %v2035
    %v2171 = vunpack.c.l.b16 %v2036
    %v2172 = vunpack.c.l.b16 %v2037
    %v2173 = vunpack.c.l.b16 %v2038
    %v2174 = vunpack.c.l.b16 %v2039
    %v2175 = vunpack.c.l.b16 %v2040
    %v2176 = vunpack.c.l.b16 %v2041
    %v2177 = vunpack.c.l.b16 %v2042
    %v2178 = vunpack.c.l.b16 %v2043
    %v2179 = vunpack.c.l.b16 %v2044
    %v2180 = vunpack.c.l.b16 %v2045
    %v2181 = vpack.c.b16 %v2118, %v2117
    %v2182 = vpack.c.b16 %v2120, %v2119
    %v2183 = vpack.c.b16 %v2122, %v2121
    %v2184 = vpack.c.b16 %v2124, %v2123
    %v2185 = vpack.c.b16 %v2126, %v2125
    %v2186 = vpack.c.b16 %v2128, %v2127
    %v2187 = vpack.c.b16 %v2130, %v2129
    %v2188 = vpack.c.b16 %v2132, %v2131
    %v2189 = vpack.c.b16 %v2134, %v2133
    %v2190 = vpack.c.b16 %v2136, %v2135
    %v2191 = vpack.c.b16 %v2138, %v2137
    %v2192 = vpack.c.b16 %v2140, %v2139
    %v2193 = vpack.c.b16 %v2142, %v2141
    %v2194 = vpack.c.b16 %v2144, %v2143
    %v2195 = vpack.c.b16 %v2146, %v2145
    %v2196 = vpack.c.b16 %v2148, %v2147
    %v2197 = vpack.c.b16 %v2150, %v2149
    %v2198 = vpack.c.b16 %v2152, %v2151
    %v2199 = vpack.c.b16 %v2154, %v2153
    %v2200 = vpack.c.b16 %v2156, %v2155
    %v2201 = vpack.c.b16 %v2158, %v2157
    %v2202 = vpack.c.b16 %v2160, %v2159
    %v2203 = vpack.c.b16 %v2162, %v2161
    %v2204 = vpack.c.b16 %v2164, %v2163
    %v2205 = vpack.c.b16 %v2166, %v2165
    %v2206 = vpack.c.b16 %v2168, %v2167
    %v2207 = vpack.c.b16 %v2170, %v2169
    %v2208 = vpack.c.b16 %v2172, %v2171
    %v2209 = vpack.c.b16 %v2174, %v2173
    %v2210 = vpack.c.b16 %v2176, %v2175
    %v2211 = vpack.c.b16 %v2178, %v2177
    %v2212 = vpack.c.b16 %v2180, %v2179
    %2245 = vmatprep.subr.bf16.mxu0 0
    %2246 = vmatpush1.bf16.msra.mxu0 %v2181
    %2247 = vmatprep.subr.bf16.mxu0 0
    %2248 = vmatpush1.bf16.msra.mxu0 %v2182
    %2249 = vmatprep.subr.bf16.mxu0 0
    %2250 = vmatpush1.bf16.msra.mxu0 %v2183
    %2251 = vmatprep.subr.bf16.mxu0 0
    %2252 = vmatpush1.bf16.msra.mxu0 %v2184
    %2253 = vmatprep.subr.bf16.mxu0 0
    %2254 = vmatpush1.bf16.msra.mxu0 %v2185
    %2255 = vmatprep.subr.bf16.mxu0 0
    %2256 = vmatpush1.bf16.msra.mxu0 %v2186
    %2257 = vmatprep.subr.bf16.mxu0 0
    %2258 = vmatpush1.bf16.msra.mxu0 %v2187
    %2259 = vmatprep.subr.bf16.mxu0 0
    %2260 = vmatpush1.bf16.msra.mxu0 %v2188
    %2261 = vmatprep.subr.bf16.mxu0 0
    %2262 = vmatpush1.bf16.msra.mxu0 %v2189
    %2263 = vmatprep.subr.bf16.mxu0 0
    %2264 = vmatpush1.bf16.msra.mxu0 %v2190
    %2265 = vmatprep.subr.bf16.mxu0 0
    %2266 = vmatpush1.bf16.msra.mxu0 %v2191
    %2267 = vmatprep.subr.bf16.mxu0 0
    %2268 = vmatpush1.bf16.msra.mxu0 %v2192
    %2269 = vmatprep.subr.bf16.mxu0 0
    %2270 = vmatpush1.bf16.msra.mxu0 %v2193
    %2271 = vmatprep.subr.bf16.mxu0 0
    %2272 = vmatpush1.bf16.msra.mxu0 %v2194
    %2273 = vmatprep.subr.bf16.mxu0 0
    %2274 = vmatpush1.bf16.msra.mxu0 %v2195
    %2275 = vmatprep.subr.bf16.mxu0 0
    %2276 = vmatpush1.bf16.msra.mxu0 %v2196
    %2277 = vmatprep.mubr.bf16.mxu0 %v583
    %2278 = vmatmul.mubr.bf16.gmra.mrb[0].mxu0 %v582
    %v2279 = vpop.f32.mrb[0].mxu0
    %v2280 = vadd.f32 %v2051, %v2279
    %v2281 = vpop.f32.mrb[0].mxu0
    %v2282 = vpop.f32.mrb[0].mxu0
    %v2283 = vadd.f32 %v2051, %v2282
    %v2284 = vpop.f32.mrb[0].mxu0
    %2285 = vdwg.mxu0
    %2286 = vmatprep.subr.bf16.mxu0 0
    %2287 = vmatpush1.bf16.msra.mxu0 %v2197
    %2288 = vmatprep.subr.bf16.mxu0 0
    %2289 = vmatpush1.bf16.msra.mxu0 %v2198
    %2290 = vmatprep.subr.bf16.mxu0 0
    %2291 = vmatpush1.bf16.msra.mxu0 %v2199
    %2292 = vmatprep.subr.bf16.mxu0 0
    %2293 = vmatpush1.bf16.msra.mxu0 %v2200
    %2294 = vmatprep.subr.bf16.mxu0 0
    %2295 = vmatpush1.bf16.msra.mxu0 %v2201
    %2296 = vmatprep.subr.bf16.mxu0 0
    %2297 = vmatpush1.bf16.msra.mxu0 %v2202
    %2298 = vmatprep.subr.bf16.mxu0 0
    %2299 = vmatpush1.bf16.msra.mxu0 %v2203
    %2300 = vmatprep.subr.bf16.mxu0 0
    %2301 = vmatpush1.bf16.msra.mxu0 %v2204
    %2302 = vmatprep.subr.bf16.mxu0 0
    %2303 = vmatpush1.bf16.msra.mxu0 %v2205
    %2304 = vmatprep.subr.bf16.mxu0 0
    %2305 = vmatpush1.bf16.msra.mxu0 %v2206
    %2306 = vmatprep.subr.bf16.mxu0 0
    %2307 = vmatpush1.bf16.msra.mxu0 %v2207
    %2308 = vmatprep.subr.bf16.mxu0 0
    %2309 = vmatpush1.bf16.msra.mxu0 %v2208
    %2310 = vmatprep.subr.bf16.mxu0 0
    %2311 = vmatpush1.bf16.msra.mxu0 %v2209
    %2312 = vmatprep.subr.bf16.mxu0 0
    %2313 = vmatpush1.bf16.msra.mxu0 %v2210
    %2314 = vmatprep.subr.bf16.mxu0 0
    %2315 = vmatpush1.bf16.msra.mxu0 %v2211
    %2316 = vmatprep.subr.bf16.mxu0 0
    %2317 = vmatpush1.bf16.msra.mxu0 %v2212
    %2318 = vmatprep.mubr.bf16.mxu0 %v585
    %2319 = vmatmul.mubr.bf16.gmra.mrb[0].mxu0 %v584
    %v2320 = vpop.f32.mrb[0].mxu0
    %v2321 = vadd.f32 %v2280, %v2320
    %v2322 = vpop.f32.mrb[0].mxu0
    %v2323 = vpop.f32.mrb[0].mxu0
    %v2324 = vadd.f32 %v2283, %v2323
    %v2325 = vpop.f32.mrb[0].mxu0
    %2326 = vdwg.mxu0
    %v2327 = vtanh.pop %v2321
    %v2328 = vtanh.pop %v2324
    %2329 = vst [vmem:[#allocation8 + $0x20] sm:$0xff] %v2327
    %2330 = vst [vmem:[#allocation8 + $0x58] sm:$0xff] %v2328
    %v2331 = vld [vmem:[#allocation7 + $0x14] sm:$0xf]
    %v2332 = vld [vmem:[#allocation7 + $0x30] sm:$0xf]
    %v2333 = vld [vmem:[#allocation7 + $0x4c] sm:$0xf]
    %v2334 = vld [vmem:[#allocation7 + $0x68] sm:$0xf]
    %v2335 = vld [vmem:[#allocation7 + $0x84] sm:$0xf]
    %v2336 = vld [vmem:[#allocation7 + $0xa0] sm:$0xf]
    %v2337 = vld [vmem:[#allocation7 + $0xbc] sm:$0xf]
    %v2338 = vld [vmem:[#allocation7 + $0xd8] sm:$0xf]
    %v2339 = vld [vmem:[#allocation7 + $0xf4] sm:$0xf]
    %v2340 = vld [vmem:[#allocation7 + $0x110] sm:$0xf]
    %v2341 = vld [vmem:[#allocation7 + $0x12c] sm:$0xf]
    %v2342 = vld [vmem:[#allocation7 + $0x148] sm:$0xf]
    %v2343 = vld [vmem:[#allocation7 + $0x164] sm:$0xf]
    %v2344 = vld [vmem:[#allocation7 + $0x180] sm:$0xf]
    %v2345 = vld [vmem:[#allocation7 + $0x19c] sm:$0xf]
    %v2346 = vld [vmem:[#allocation7 + $0x1b8] sm:$0xf]
    %v2347 = vld [vmem:[#allocation7 + $0x1d4] sm:$0xf]
    %v2348 = vld [vmem:[#allocation7 + $0x1f0] sm:$0xf]
    %v2349 = vld [vmem:[#allocation7 + $0x20c] sm:$0xf]
    %v2350 = vld [vmem:[#allocation7 + $0x228] sm:$0xf]
    %v2351 = vld [vmem:[#allocation7 + $0x244] sm:$0xf]
    %v2352 = vld [vmem:[#allocation7 + $0x260] sm:$0xf]
    %v2353 = vld [vmem:[#allocation7 + $0x27c] sm:$0xf]
    %v2354 = vld [vmem:[#allocation7 + $0x298] sm:$0xf]
    %v2355 = vld [vmem:[#allocation7 + $0x2b4] sm:$0xf]
    %v2356 = vld [vmem:[#allocation7 + $0x2d0] sm:$0xf]
    %v2357 = vld [vmem:[#allocation7 + $0x2ec] sm:$0xf]
    %v2358 = vld [vmem:[#allocation7 + $0x308] sm:$0xf]
    %v2359 = vld [vmem:[#allocation7 + $0x324] sm:$0xf]
    %v2360 = vld [vmem:[#allocation7 + $0x340] sm:$0xf]
    %v2361 = vld [vmem:[#allocation7 + $0x35c] sm:$0xf]
    %v2362 = vld [vmem:[#allocation7 + $0x378] sm:$0xf]
    %v2363 = vld [vmem:[#allocation7 + $0x394] sm:$0xf]
    %v2364 = vld [vmem:[#allocation7 + $0x3b0] sm:$0xf]
    %v2365 = vld [vmem:[#allocation7 + $0x3cc] sm:$0xf]
    %v2366 = vld [vmem:[#allocation7 + $0x3e8] sm:$0xf]
    %v2367 = vld [vmem:[#allocation7 + $0x404] sm:$0xf]
    %v2368 = vld [vmem:[#allocation7 + $0x420] sm:$0xf]
    %v2369 = vld [vmem:[#allocation7 + $0x43c] sm:$0xf]
    %v2370 = vld [vmem:[#allocation7 + $0x458] sm:$0xf]
    %v2371 = vld [vmem:[#allocation7 + $0x474] sm:$0xf]
    %v2372 = vld [vmem:[#allocation7 + $0x490] sm:$0xf]
    %v2373 = vld [vmem:[#allocation7 + $0x4ac] sm:$0xf]
    %v2374 = vld [vmem:[#allocation7 + $0x4c8] sm:$0xf]
    %v2375 = vld [vmem:[#allocation7 + $0x4e4] sm:$0xf]
    %v2376 = vld [vmem:[#allocation7 + $0x500] sm:$0xf]
    %v2377 = vld [vmem:[#allocation7 + $0x51c] sm:$0xf]
    %v2378 = vld [vmem:[#allocation7 + $0x538] sm:$0xf]
    %v2379 = vld [vmem:[#allocation7 + $0x554] sm:$0xf]
    %v2380 = vld [vmem:[#allocation7 + $0x570] sm:$0xf]
    %v2381 = vld [vmem:[#allocation7 + $0x58c] sm:$0xf]
    %v2382 = vld [vmem:[#allocation7 + $0x5a8] sm:$0xf]
    %v2383 = vld [vmem:[#allocation7 + $0x5c4] sm:$0xf]
    %v2384 = vld [vmem:[#allocation7 + $0x5e0] sm:$0xf]
    %v2385 = vld [vmem:[#allocation7 + $0x5fc] sm:$0xf]
    %v2386 = vld [vmem:[#allocation7 + $0x618] sm:$0xf]
    %v2387 = vld [vmem:[#allocation7 + $0x634] sm:$0xf]
    %v2388 = vld [vmem:[#allocation7 + $0x650] sm:$0xf]
    %v2389 = vld [vmem:[#allocation7 + $0x66c] sm:$0xf]
    %v2390 = vld [vmem:[#allocation7 + $0x688] sm:$0xf]
    %v2391 = vld [vmem:[#allocation7 + $0x6a4] sm:$0xf]
    %v2392 = vld [vmem:[#allocation7 + $0x6c0] sm:$0xf]
    %v2393 = vld [vmem:[#allocation7 + $0x6dc] sm:$0xf]
    %v2394 = vld [vmem:[#allocation7 + $0x6f8] sm:$0xf]
    %v2395 = vld [vmem:[%s8 + $0x5] sm:$0x1]
    %v2397 = vlaneseq
    %v2398 = vshrl.u32 %v2397, 7
    %v2399 = vsub.s32 0, %v2398
    %v2400 = vrot.slane %v2395, %v2399
    %v2466 = vunpack.c.l.b16 %v2331
    %v2467 = vunpack.c.l.b16 %v2332
    %v2468 = vunpack.c.l.b16 %v2333
    %v2469 = vunpack.c.l.b16 %v2334
    %v2470 = vunpack.c.l.b16 %v2335
    %v2471 = vunpack.c.l.b16 %v2336
    %v2472 = vunpack.c.l.b16 %v2337
    %v2473 = vunpack.c.l.b16 %v2338
    %v2474 = vunpack.c.l.b16 %v2339
    %v2475 = vunpack.c.l.b16 %v2340
    %v2476 = vunpack.c.l.b16 %v2341
    %v2477 = vunpack.c.l.b16 %v2342
    %v2478 = vunpack.c.l.b16 %v2343
    %v2479 = vunpack.c.l.b16 %v2344
    %v2480 = vunpack.c.l.b16 %v2345
    %v2481 = vunpack.c.l.b16 %v2346
    %v2482 = vunpack.c.l.b16 %v2347
    %v2483 = vunpack.c.l.b16 %v2348
    %v2484 = vunpack.c.l.b16 %v2349
    %v2485 = vunpack.c.l.b16 %v2350
    %v2486 = vunpack.c.l.b16 %v2351
    %v2487 = vunpack.c.l.b16 %v2352
    %v2488 = vunpack.c.l.b16 %v2353
    %v2489 = vunpack.c.l.b16 %v2354
    %v2490 = vunpack.c.l.b16 %v2355
    %v2491 = vunpack.c.l.b16 %v2356
    %v2492 = vunpack.c.l.b16 %v2357
    %v2493 = vunpack.c.l.b16 %v2358
    %v2494 = vunpack.c.l.b16 %v2359
    %v2495 = vunpack.c.l.b16 %v2360
    %v2496 = vunpack.c.l.b16 %v2361
    %v2497 = vunpack.c.l.b16 %v2362
    %v2498 = vunpack.c.l.b16 %v2363
    %v2499 = vunpack.c.l.b16 %v2364
    %v2500 = vunpack.c.l.b16 %v2365
    %v2501 = vunpack.c.l.b16 %v2366
    %v2502 = vunpack.c.l.b16 %v2367
    %v2503 = vunpack.c.l.b16 %v2368
    %v2504 = vunpack.c.l.b16 %v2369
    %v2505 = vunpack.c.l.b16 %v2370
    %v2506 = vunpack.c.l.b16 %v2371
    %v2507 = vunpack.c.l.b16 %v2372
    %v2508 = vunpack.c.l.b16 %v2373
    %v2509 = vunpack.c.l.b16 %v2374
    %v2510 = vunpack.c.l.b16 %v2375
    %v2511 = vunpack.c.l.b16 %v2376
    %v2512 = vunpack.c.l.b16 %v2377
    %v2513 = vunpack.c.l.b16 %v2378
    %v2514 = vunpack.c.l.b16 %v2379
    %v2515 = vunpack.c.l.b16 %v2380
    %v2516 = vunpack.c.l.b16 %v2381
    %v2517 = vunpack.c.l.b16 %v2382
    %v2518 = vunpack.c.l.b16 %v2383
    %v2519 = vunpack.c.l.b16 %v2384
    %v2520 = vunpack.c.l.b16 %v2385
    %v2521 = vunpack.c.l.b16 %v2386
    %v2522 = vunpack.c.l.b16 %v2387
    %v2523 = vunpack.c.l.b16 %v2388
    %v2524 = vunpack.c.l.b16 %v2389
    %v2525 = vunpack.c.l.b16 %v2390
    %v2526 = vunpack.c.l.b16 %v2391
    %v2527 = vunpack.c.l.b16 %v2392
    %v2528 = vunpack.c.l.b16 %v2393
    %v2529 = vunpack.c.l.b16 %v2394
    %v2530 = vpack.c.b16 %v2467, %v2466
    %v2531 = vpack.c.b16 %v2469, %v2468
    %v2532 = vpack.c.b16 %v2471, %v2470
    %v2533 = vpack.c.b16 %v2473, %v2472
    %v2534 = vpack.c.b16 %v2475, %v2474
    %v2535 = vpack.c.b16 %v2477, %v2476
    %v2536 = vpack.c.b16 %v2479, %v2478
    %v2537 = vpack.c.b16 %v2481, %v2480
    %v2538 = vpack.c.b16 %v2483, %v2482
    %v2539 = vpack.c.b16 %v2485, %v2484
    %v2540 = vpack.c.b16 %v2487, %v2486
    %v2541 = vpack.c.b16 %v2489, %v2488
    %v2542 = vpack.c.b16 %v2491, %v2490
    %v2543 = vpack.c.b16 %v2493, %v2492
    %v2544 = vpack.c.b16 %v2495, %v2494
    %v2545 = vpack.c.b16 %v2497, %v2496
    %v2546 = vpack.c.b16 %v2499, %v2498
    %v2547 = vpack.c.b16 %v2501, %v2500
    %v2548 = vpack.c.b16 %v2503, %v2502
    %v2549 = vpack.c.b16 %v2505, %v2504
    %v2550 = vpack.c.b16 %v2507, %v2506
    %v2551 = vpack.c.b16 %v2509, %v2508
    %v2552 = vpack.c.b16 %v2511, %v2510
    %v2553 = vpack.c.b16 %v2513, %v2512
    %v2554 = vpack.c.b16 %v2515, %v2514
    %v2555 = vpack.c.b16 %v2517, %v2516
    %v2556 = vpack.c.b16 %v2519, %v2518
    %v2557 = vpack.c.b16 %v2521, %v2520
    %v2558 = vpack.c.b16 %v2523, %v2522
    %v2559 = vpack.c.b16 %v2525, %v2524
    %v2560 = vpack.c.b16 %v2527, %v2526
    %v2561 = vpack.c.b16 %v2529, %v2528
    %2594 = vmatprep.subr.bf16.mxu0 0
    %2595 = vmatpush1.bf16.msra.mxu0 %v2530
    %2596 = vmatprep.subr.bf16.mxu0 0
    %2597 = vmatpush1.bf16.msra.mxu0 %v2531
    %2598 = vmatprep.subr.bf16.mxu0 0
    %2599 = vmatpush1.bf16.msra.mxu0 %v2532
    %2600 = vmatprep.subr.bf16.mxu0 0
    %2601 = vmatpush1.bf16.msra.mxu0 %v2533
    %2602 = vmatprep.subr.bf16.mxu0 0
    %2603 = vmatpush1.bf16.msra.mxu0 %v2534
    %2604 = vmatprep.subr.bf16.mxu0 0
    %2605 = vmatpush1.bf16.msra.mxu0 %v2535
    %2606 = vmatprep.subr.bf16.mxu0 0
    %2607 = vmatpush1.bf16.msra.mxu0 %v2536
    %2608 = vmatprep.subr.bf16.mxu0 0
    %2609 = vmatpush1.bf16.msra.mxu0 %v2537
    %2610 = vmatprep.subr.bf16.mxu0 0
    %2611 = vmatpush1.bf16.msra.mxu0 %v2538
    %2612 = vmatprep.subr.bf16.mxu0 0
    %2613 = vmatpush1.bf16.msra.mxu0 %v2539
    %2614 = vmatprep.subr.bf16.mxu0 0
    %2615 = vmatpush1.bf16.msra.mxu0 %v2540
    %2616 = vmatprep.subr.bf16.mxu0 0
    %2617 = vmatpush1.bf16.msra.mxu0 %v2541
    %2618 = vmatprep.subr.bf16.mxu0 0
    %2619 = vmatpush1.bf16.msra.mxu0 %v2542
    %2620 = vmatprep.subr.bf16.mxu0 0
    %2621 = vmatpush1.bf16.msra.mxu0 %v2543
    %2622 = vmatprep.subr.bf16.mxu0 0
    %2623 = vmatpush1.bf16.msra.mxu0 %v2544
    %2624 = vmatprep.subr.bf16.mxu0 0
    %2625 = vmatpush1.bf16.msra.mxu0 %v2545
    %2626 = vmatprep.mubr.bf16.mxu0 %v583
    %2627 = vmatmul.mubr.bf16.gmra.mrb[0].mxu0 %v582
    %v2628 = vpop.f32.mrb[0].mxu0
    %v2629 = vadd.f32 %v2400, %v2628
    %v2630 = vpop.f32.mrb[0].mxu0
    %v2631 = vpop.f32.mrb[0].mxu0
    %v2632 = vadd.f32 %v2400, %v2631
    %v2633 = vpop.f32.mrb[0].mxu0
    %2634 = vdwg.mxu0
    %2635 = vmatprep.subr.bf16.mxu0 0
    %2636 = vmatpush1.bf16.msra.mxu0 %v2546
    %2637 = vmatprep.subr.bf16.mxu0 0
    %2638 = vmatpush1.bf16.msra.mxu0 %v2547
    %2639 = vmatprep.subr.bf16.mxu0 0
    %2640 = vmatpush1.bf16.msra.mxu0 %v2548
    %2641 = vmatprep.subr.bf16.mxu0 0
    %2642 = vmatpush1.bf16.msra.mxu0 %v2549
    %2643 = vmatprep.subr.bf16.mxu0 0
    %2644 = vmatpush1.bf16.msra.mxu0 %v2550
    %2645 = vmatprep.subr.bf16.mxu0 0
    %2646 = vmatpush1.bf16.msra.mxu0 %v2551
    %2647 = vmatprep.subr.bf16.mxu0 0
    %2648 = vmatpush1.bf16.msra.mxu0 %v2552
    %2649 = vmatprep.subr.bf16.mxu0 0
    %2650 = vmatpush1.bf16.msra.mxu0 %v2553
    %2651 = vmatprep.subr.bf16.mxu0 0
    %2652 = vmatpush1.bf16.msra.mxu0 %v2554
    %2653 = vmatprep.subr.bf16.mxu0 0
    %2654 = vmatpush1.bf16.msra.mxu0 %v2555
    %2655 = vmatprep.subr.bf16.mxu0 0
    %2656 = vmatpush1.bf16.msra.mxu0 %v2556
    %2657 = vmatprep.subr.bf16.mxu0 0
    %2658 = vmatpush1.bf16.msra.mxu0 %v2557
    %2659 = vmatprep.subr.bf16.mxu0 0
    %2660 = vmatpush1.bf16.msra.mxu0 %v2558
    %2661 = vmatprep.subr.bf16.mxu0 0
    %2662 = vmatpush1.bf16.msra.mxu0 %v2559
    %2663 = vmatprep.subr.bf16.mxu0 0
    %2664 = vmatpush1.bf16.msra.mxu0 %v2560
    %2665 = vmatprep.subr.bf16.mxu0 0
    %2666 = vmatpush1.bf16.msra.mxu0 %v2561
    %2667 = vmatprep.mubr.bf16.mxu0 %v585
    %2668 = vmatmul.mubr.bf16.gmra.mrb[0].mxu0 %v584
    %v2669 = vpop.f32.mrb[0].mxu0
    %v2670 = vadd.f32 %v2629, %v2669
    %v2671 = vpop.f32.mrb[0].mxu0
    %v2672 = vpop.f32.mrb[0].mxu0
    %v2673 = vadd.f32 %v2632, %v2672
    %v2674 = vpop.f32.mrb[0].mxu0
    %2675 = vdwg.mxu0
    %v2676 = vtanh.pop %v2670
    %v2677 = vtanh.pop %v2673
    %2678 = vst [vmem:[#allocation8 + $0x28] sm:$0xff] %v2676
    %2679 = vst [vmem:[#allocation8 + $0x60] sm:$0xff] %v2677
    %v2680 = vld [vmem:[#allocation7 + $0x18] sm:$0xf]
    %v2681 = vld [vmem:[#allocation7 + $0x34] sm:$0xf]
    %v2682 = vld [vmem:[#allocation7 + $0x50] sm:$0xf]
    %v2683 = vld [vmem:[#allocation7 + $0x6c] sm:$0xf]
    %v2684 = vld [vmem:[#allocation7 + $0x88] sm:$0xf]
    %v2685 = vld [vmem:[#allocation7 + $0xa4] sm:$0xf]
    %v2686 = vld [vmem:[#allocation7 + $0xc0] sm:$0xf]
    %v2687 = vld [vmem:[#allocation7 + $0xdc] sm:$0xf]
    %v2688 = vld [vmem:[#allocation7 + $0xf8] sm:$0xf]
    %v2689 = vld [vmem:[#allocation7 + $0x114] sm:$0xf]
    %v2690 = vld [vmem:[#allocation7 + $0x130] sm:$0xf]
    %v2691 = vld [vmem:[#allocation7 + $0x14c] sm:$0xf]
    %v2692 = vld [vmem:[#allocation7 + $0x168] sm:$0xf]
    %v2693 = vld [vmem:[#allocation7 + $0x184] sm:$0xf]
    %v2694 = vld [vmem:[#allocation7 + $0x1a0] sm:$0xf]
    %v2695 = vld [vmem:[#allocation7 + $0x1bc] sm:$0xf]
    %v2696 = vld [vmem:[#allocation7 + $0x1d8] sm:$0xf]
    %v2697 = vld [vmem:[#allocation7 + $0x1f4] sm:$0xf]
    %v2698 = vld [vmem:[#allocation7 + $0x210] sm:$0xf]
    %v2699 = vld [vmem:[#allocation7 + $0x22c] sm:$0xf]
    %v2700 = vld [vmem:[#allocation7 + $0x248] sm:$0xf]
    %v2701 = vld [vmem:[#allocation7 + $0x264] sm:$0xf]
    %v2702 = vld [vmem:[#allocation7 + $0x280] sm:$0xf]
    %v2703 = vld [vmem:[#allocation7 + $0x29c] sm:$0xf]
    %v2704 = vld [vmem:[#allocation7 + $0x2b8] sm:$0xf]
    %v2705 = vld [vmem:[#allocation7 + $0x2d4] sm:$0xf]
    %v2706 = vld [vmem:[#allocation7 + $0x2f0] sm:$0xf]
    %v2707 = vld [vmem:[#allocation7 + $0x30c] sm:$0xf]
    %v2708 = vld [vmem:[#allocation7 + $0x328] sm:$0xf]
    %v2709 = vld [vmem:[#allocation7 + $0x344] sm:$0xf]
    %v2710 = vld [vmem:[#allocation7 + $0x360] sm:$0xf]
    %v2711 = vld [vmem:[#allocation7 + $0x37c] sm:$0xf]
    %v2712 = vld [vmem:[#allocation7 + $0x398] sm:$0xf]
    %v2713 = vld [vmem:[#allocation7 + $0x3b4] sm:$0xf]
    %v2714 = vld [vmem:[#allocation7 + $0x3d0] sm:$0xf]
    %v2715 = vld [vmem:[#allocation7 + $0x3ec] sm:$0xf]
    %v2716 = vld [vmem:[#allocation7 + $0x408] sm:$0xf]
    %v2717 = vld [vmem:[#allocation7 + $0x424] sm:$0xf]
    %v2718 = vld [vmem:[#allocation7 + $0x440] sm:$0xf]
    %v2719 = vld [vmem:[#allocation7 + $0x45c] sm:$0xf]
    %v2720 = vld [vmem:[#allocation7 + $0x478] sm:$0xf]
    %v2721 = vld [vmem:[#allocation7 + $0x494] sm:$0xf]
    %v2722 = vld [vmem:[#allocation7 + $0x4b0] sm:$0xf]
    %v2723 = vld [vmem:[#allocation7 + $0x4cc] sm:$0xf]
    %v2724 = vld [vmem:[#allocation7 + $0x4e8] sm:$0xf]
    %v2725 = vld [vmem:[#allocation7 + $0x504] sm:$0xf]
    %v2726 = vld [vmem:[#allocation7 + $0x520] sm:$0xf]
    %v2727 = vld [vmem:[#allocation7 + $0x53c] sm:$0xf]
    %v2728 = vld [vmem:[#allocation7 + $0x558] sm:$0xf]
    %v2729 = vld [vmem:[#allocation7 + $0x574] sm:$0xf]
    %v2730 = vld [vmem:[#allocation7 + $0x590] sm:$0xf]
    %v2731 = vld [vmem:[#allocation7 + $0x5ac] sm:$0xf]
    %v2732 = vld [vmem:[#allocation7 + $0x5c8] sm:$0xf]
    %v2733 = vld [vmem:[#allocation7 + $0x5e4] sm:$0xf]
    %v2734 = vld [vmem:[#allocation7 + $0x600] sm:$0xf]
    %v2735 = vld [vmem:[#allocation7 + $0x61c] sm:$0xf]
    %v2736 = vld [vmem:[#allocation7 + $0x638] sm:$0xf]
    %v2737 = vld [vmem:[#allocation7 + $0x654] sm:$0xf]
    %v2738 = vld [vmem:[#allocation7 + $0x670] sm:$0xf]
    %v2739 = vld [vmem:[#allocation7 + $0x68c] sm:$0xf]
    %v2740 = vld [vmem:[#allocation7 + $0x6a8] sm:$0xf]
    %v2741 = vld [vmem:[#allocation7 + $0x6c4] sm:$0xf]
    %v2742 = vld [vmem:[#allocation7 + $0x6e0] sm:$0xf]
    %v2743 = vld [vmem:[#allocation7 + $0x6fc] sm:$0xf]
    %v2744 = vld [vmem:[%s8 + $0x6] sm:$0x1]
    %v2746 = vlaneseq
    %v2747 = vshrl.u32 %v2746, 7
    %v2748 = vsub.s32 0, %v2747
    %v2749 = vrot.slane %v2744, %v2748
    %v2815 = vunpack.c.l.b16 %v2680
    %v2816 = vunpack.c.l.b16 %v2681
    %v2817 = vunpack.c.l.b16 %v2682
    %v2818 = vunpack.c.l.b16 %v2683
    %v2819 = vunpack.c.l.b16 %v2684
    %v2820 = vunpack.c.l.b16 %v2685
    %v2821 = vunpack.c.l.b16 %v2686
    %v2822 = vunpack.c.l.b16 %v2687
    %v2823 = vunpack.c.l.b16 %v2688
    %v2824 = vunpack.c.l.b16 %v2689
    %v2825 = vunpack.c.l.b16 %v2690
    %v2826 = vunpack.c.l.b16 %v2691
    %v2827 = vunpack.c.l.b16 %v2692
    %v2828 = vunpack.c.l.b16 %v2693
    %v2829 = vunpack.c.l.b16 %v2694
    %v2830 = vunpack.c.l.b16 %v2695
    %v2831 = vunpack.c.l.b16 %v2696
    %v2832 = vunpack.c.l.b16 %v2697
    %v2833 = vunpack.c.l.b16 %v2698
    %v2834 = vunpack.c.l.b16 %v2699
    %v2835 = vunpack.c.l.b16 %v2700
    %v2836 = vunpack.c.l.b16 %v2701
    %v2837 = vunpack.c.l.b16 %v2702
    %v2838 = vunpack.c.l.b16 %v2703
    %v2839 = vunpack.c.l.b16 %v2704
    %v2840 = vunpack.c.l.b16 %v2705
    %v2841 = vunpack.c.l.b16 %v2706
    %v2842 = vunpack.c.l.b16 %v2707
    %v2843 = vunpack.c.l.b16 %v2708
    %v2844 = vunpack.c.l.b16 %v2709
    %v2845 = vunpack.c.l.b16 %v2710
    %v2846 = vunpack.c.l.b16 %v2711
    %v2847 = vunpack.c.l.b16 %v2712
    %v2848 = vunpack.c.l.b16 %v2713
    %v2849 = vunpack.c.l.b16 %v2714
    %v2850 = vunpack.c.l.b16 %v2715
    %v2851 = vunpack.c.l.b16 %v2716
    %v2852 = vunpack.c.l.b16 %v2717
    %v2853 = vunpack.c.l.b16 %v2718
    %v2854 = vunpack.c.l.b16 %v2719
    %v2855 = vunpack.c.l.b16 %v2720
    %v2856 = vunpack.c.l.b16 %v2721
    %v2857 = vunpack.c.l.b16 %v2722
    %v2858 = vunpack.c.l.b16 %v2723
    %v2859 = vunpack.c.l.b16 %v2724
    %v2860 = vunpack.c.l.b16 %v2725
    %v2861 = vunpack.c.l.b16 %v2726
    %v2862 = vunpack.c.l.b16 %v2727
    %v2863 = vunpack.c.l.b16 %v2728
    %v2864 = vunpack.c.l.b16 %v2729
    %v2865 = vunpack.c.l.b16 %v2730
    %v2866 = vunpack.c.l.b16 %v2731
    %v2867 = vunpack.c.l.b16 %v2732
    %v2868 = vunpack.c.l.b16 %v2733
    %v2869 = vunpack.c.l.b16 %v2734
    %v2870 = vunpack.c.l.b16 %v2735
    %v2871 = vunpack.c.l.b16 %v2736
    %v2872 = vunpack.c.l.b16 %v2737
    %v2873 = vunpack.c.l.b16 %v2738
    %v2874 = vunpack.c.l.b16 %v2739
    %v2875 = vunpack.c.l.b16 %v2740
    %v2876 = vunpack.c.l.b16 %v2741
    %v2877 = vunpack.c.l.b16 %v2742
    %v2878 = vunpack.c.l.b16 %v2743
    %v2879 = vpack.c.b16 %v2816, %v2815
    %v2880 = vpack.c.b16 %v2818, %v2817
    %v2881 = vpack.c.b16 %v2820, %v2819
    %v2882 = vpack.c.b16 %v2822, %v2821
    %v2883 = vpack.c.b16 %v2824, %v2823
    %v2884 = vpack.c.b16 %v2826, %v2825
    %v2885 = vpack.c.b16 %v2828, %v2827
    %v2886 = vpack.c.b16 %v2830, %v2829
    %v2887 = vpack.c.b16 %v2832, %v2831
    %v2888 = vpack.c.b16 %v2834, %v2833
    %v2889 = vpack.c.b16 %v2836, %v2835
    %v2890 = vpack.c.b16 %v2838, %v2837
    %v2891 = vpack.c.b16 %v2840, %v2839
    %v2892 = vpack.c.b16 %v2842, %v2841
    %v2893 = vpack.c.b16 %v2844, %v2843
    %v2894 = vpack.c.b16 %v2846, %v2845
    %v2895 = vpack.c.b16 %v2848, %v2847
    %v2896 = vpack.c.b16 %v2850, %v2849
    %v2897 = vpack.c.b16 %v2852, %v2851
    %v2898 = vpack.c.b16 %v2854, %v2853
    %v2899 = vpack.c.b16 %v2856, %v2855
    %v2900 = vpack.c.b16 %v2858, %v2857
    %v2901 = vpack.c.b16 %v2860, %v2859
    %v2902 = vpack.c.b16 %v2862, %v2861
    %v2903 = vpack.c.b16 %v2864, %v2863
    %v2904 = vpack.c.b16 %v2866, %v2865
    %v2905 = vpack.c.b16 %v2868, %v2867
    %v2906 = vpack.c.b16 %v2870, %v2869
    %v2907 = vpack.c.b16 %v2872, %v2871
    %v2908 = vpack.c.b16 %v2874, %v2873
    %v2909 = vpack.c.b16 %v2876, %v2875
    %v2910 = vpack.c.b16 %v2878, %v2877
    %2943 = vmatprep.subr.bf16.mxu0 0
    %2944 = vmatpush1.bf16.msra.mxu0 %v2879
    %2945 = vmatprep.subr.bf16.mxu0 0
    %2946 = vmatpush1.bf16.msra.mxu0 %v2880
    %2947 = vmatprep.subr.bf16.mxu0 0
    %2948 = vmatpush1.bf16.msra.mxu0 %v2881
    %2949 = vmatprep.subr.bf16.mxu0 0
    %2950 = vmatpush1.bf16.msra.mxu0 %v2882
    %2951 = vmatprep.subr.bf16.mxu0 0
    %2952 = vmatpush1.bf16.msra.mxu0 %v2883
    %2953 = vmatprep.subr.bf16.mxu0 0
    %2954 = vmatpush1.bf16.msra.mxu0 %v2884
    %2955 = vmatprep.subr.bf16.mxu0 0
    %2956 = vmatpush1.bf16.msra.mxu0 %v2885
    %2957 = vmatprep.subr.bf16.mxu0 0
    %2958 = vmatpush1.bf16.msra.mxu0 %v2886
    %2959 = vmatprep.subr.bf16.mxu0 0
    %2960 = vmatpush1.bf16.msra.mxu0 %v2887
    %2961 = vmatprep.subr.bf16.mxu0 0
    %2962 = vmatpush1.bf16.msra.mxu0 %v2888
    %2963 = vmatprep.subr.bf16.mxu0 0
    %2964 = vmatpush1.bf16.msra.mxu0 %v2889
    %2965 = vmatprep.subr.bf16.mxu0 0
    %2966 = vmatpush1.bf16.msra.mxu0 %v2890
    %2967 = vmatprep.subr.bf16.mxu0 0
    %2968 = vmatpush1.bf16.msra.mxu0 %v2891
    %2969 = vmatprep.subr.bf16.mxu0 0
    %2970 = vmatpush1.bf16.msra.mxu0 %v2892
    %2971 = vmatprep.subr.bf16.mxu0 0
    %2972 = vmatpush1.bf16.msra.mxu0 %v2893
    %2973 = vmatprep.subr.bf16.mxu0 0
    %2974 = vmatpush1.bf16.msra.mxu0 %v2894
    %2975 = vmatprep.mubr.bf16.mxu0 %v583
    %2976 = vmatmul.mubr.bf16.gmra.mrb[0].mxu0 %v582
    %v2977 = vpop.f32.mrb[0].mxu0
    %v2978 = vadd.f32 %v2749, %v2977
    %v2979 = vpop.f32.mrb[0].mxu0
    %v2980 = vpop.f32.mrb[0].mxu0
    %v2981 = vadd.f32 %v2749, %v2980
    %v2982 = vpop.f32.mrb[0].mxu0
    %2983 = vdwg.mxu0
    %2984 = vmatprep.subr.bf16.mxu0 0
    %2985 = vmatpush1.bf16.msra.mxu0 %v2895
    %2986 = vmatprep.subr.bf16.mxu0 0
    %2987 = vmatpush1.bf16.msra.mxu0 %v2896
    %2988 = vmatprep.subr.bf16.mxu0 0
    %2989 = vmatpush1.bf16.msra.mxu0 %v2897
    %2990 = vmatprep.subr.bf16.mxu0 0
    %2991 = vmatpush1.bf16.msra.mxu0 %v2898
    %2992 = vmatprep.subr.bf16.mxu0 0
    %2993 = vmatpush1.bf16.msra.mxu0 %v2899
    %2994 = vmatprep.subr.bf16.mxu0 0
    %2995 = vmatpush1.bf16.msra.mxu0 %v2900
    %2996 = vmatprep.subr.bf16.mxu0 0
    %2997 = vmatpush1.bf16.msra.mxu0 %v2901
    %2998 = vmatprep.subr.bf16.mxu0 0
    %2999 = vmatpush1.bf16.msra.mxu0 %v2902
    %3000 = vmatprep.subr.bf16.mxu0 0
    %3001 = vmatpush1.bf16.msra.mxu0 %v2903
    %3002 = vmatprep.subr.bf16.mxu0 0
    %3003 = vmatpush1.bf16.msra.mxu0 %v2904
    %3004 = vmatprep.subr.bf16.mxu0 0
    %3005 = vmatpush1.bf16.msra.mxu0 %v2905
    %3006 = vmatprep.subr.bf16.mxu0 0
    %3007 = vmatpush1.bf16.msra.mxu0 %v2906
    %3008 = vmatprep.subr.bf16.mxu0 0
    %3009 = vmatpush1.bf16.msra.mxu0 %v2907
    %3010 = vmatprep.subr.bf16.mxu0 0
    %3011 = vmatpush1.bf16.msra.mxu0 %v2908
    %3012 = vmatprep.subr.bf16.mxu0 0
    %3013 = vmatpush1.bf16.msra.mxu0 %v2909
    %3014 = vmatprep.subr.bf16.mxu0 0
    %3015 = vmatpush1.bf16.msra.mxu0 %v2910
    %3016 = vmatprep.mubr.bf16.mxu0 %v585
    %3017 = vmatmul.mubr.bf16.gmra.mrb[0].mxu0 %v584
    %v3018 = vpop.f32.mrb[0].mxu0
    %v3019 = vadd.f32 %v2978, %v3018
    %v3020 = vpop.f32.mrb[0].mxu0
    %v3021 = vpop.f32.mrb[0].mxu0
    %v3022 = vadd.f32 %v2981, %v3021
    %v3023 = vpop.f32.mrb[0].mxu0
    %3024 = vdwg.mxu0
    %v3025 = vtanh.pop %v3019
    %v3026 = vtanh.pop %v3022
    %3027 = vst [vmem:[#allocation8 + $0x30] sm:$0xff] %v3025
    %3028 = vst [vmem:[#allocation8 + $0x68] sm:$0xff] %v3026
    // Predicated region
    $region50: #{tpu_custom_call.1} parent=1 // pred_check
      _
    $region51: #{tpu_custom_call.1} parent=1 // pred_check_branch
      %3030 = sbr.rel (0) target = $region53
    $region52: #{tpu_custom_call.1} parent=1 // pred_region
      %s3032 = ssub.s32 1792, 1792
      %3033 = vsyncadd [#allocation4], %s3032
      %s3034 = sshll.u32 [#allocation8], 4
      %s3035 = int_to_ptr.vmem [resolvable:$true] %s3034
      %3040 = dma.vmem_to_hbm [thread:$0]  %s3035, 1792, %s9, [#allocation4], 896, 896, 56
    $region53: #{tpu_custom_call.1} parent=1 // pred_fallthru
      _
    // Predicated region
    $region54: #{tpu_custom_call.1} parent=1 // pred_check
      _
    $region55: #{tpu_custom_call.1} parent=1 // pred_check_branch
      %3042 = sbr.rel (0) target = $region57
    $region56: #{tpu_custom_call.1} parent=1 // pred_region
      %3043 = dma.done [#allocation4], 1792
    $region57: #{tpu_custom_call.1} parent=1 // pred_fallthru
      _
    %3044 = vsyncpa [#allocation3], 1
    %3045 = vsyncpa [#allocation6], 1
    %3046 = vsyncpa [#allocation4], 1

</llo_original>
